<compile_context>
chip_gen: v5e
topology: v5e:2x2
jax: 0.10.0
libtpu: 0.0.40
codegen_flags: <defaults>
</compile_context>

<pallas_src>
import jax
import jax.numpy as jnp
from jax.experimental import pallas as pl
from jax.experimental.pallas import tpu as pltpu


def _leaky_relu(x, slope=0.2):
    return jnp.where(x > 0, x, slope * x)


def discriminator_kernel(x_ref, w1_ref, b1_ref, w2_ref, b2_ref, w3_ref, b3_ref,
                         o_ref, acc_ref):
    # grid = (batch tiles [parallel], K tiles of layer-1 [arbitrary])
    k = pl.program_id(1)

    @pl.when(k == 0)
    def _():
        acc_ref[...] = jnp.zeros_like(acc_ref)

    # Layer 1 (K-tiled): bf16 x bf16 MXU matmul, f32 accumulate.
    acc_ref[...] += jnp.dot(x_ref[...], w1_ref[...],
                            preferred_element_type=jnp.float32)

    @pl.when(k == pl.num_programs(1) - 1)
    def _():
        # All post-matmul elementwise work stays f32 (VPU/EUP friendly on v5e).
        h1 = _leaky_relu(acc_ref[...] + b1_ref[...])

        # Layer 2: bf16 operands, f32 accumulate.
        h2 = jnp.dot(h1.astype(w2_ref.dtype), w2_ref[...],
                     preferred_element_type=jnp.float32)
        h2 = _leaky_relu(h2 + b2_ref[...])

        # Layer 3 (256 -> 1): VPU multiply + lane reduction instead of a
        # one-column MXU matmul.
        logit = jnp.sum(h2 * w3_ref[...], axis=-1, keepdims=True) + b3_ref[...]
        o_ref[...] = jax.nn.sigmoid(logit).astype(o_ref.dtype)


def discriminator_forward(img, params, *, tile_b_max=256, tile_k_max=2048):
    """img: (B, C, H, W) float32 (NCHW, as in PyTorch). Returns (B, 1) f32."""
    w1, b1, w2, b2, w3, b3 = params
    B = img.shape[0]
    F = w1.shape[0]
    H1 = w1.shape[1]          # 512
    H2 = w2.shape[1]          # 256

    # Same flattening order as torch's .view(B, -1) on a contiguous NCHW tensor.
    x = img.reshape(B, -1).astype(jnp.float32)
    assert x.shape[1] == F

    # ---- batch tiling ----
    if B <= tile_b_max:
        tile_b, b_pad = B, B
    else:
        tile_b = tile_b_max
        b_pad = -(-B // tile_b) * tile_b

    # ---- K tiling of the first matmul (only needed for large F) ----
    if F <= tile_k_max:
        tile_k, f_pad = F, F
    else:
        tile_k = tile_k_max
        f_pad = -(-F // tile_k) * tile_k

    # Zero padding: padded K columns contribute nothing to the matmul; padded
    # batch rows are computed and sliced off below.
    if b_pad != B or f_pad != F:
        x = jnp.pad(x, ((0, b_pad - B), (0, f_pad - F)))
    w1p = w1 if f_pad == F else jnp.pad(w1, ((0, f_pad - F), (0, 0)))

    # bf16 matmul operands (halves DMA bytes & VMEM); f32 accumulate in-kernel.
    x_bf = x.astype(jnp.bfloat16)
    w1_bf = w1p.astype(jnp.bfloat16)
    w2_bf = w2.astype(jnp.bfloat16)
    # Final-layer weight as an f32 row vector for the VPU multiply + reduce.
    w3_row = w3.reshape(1, H2).astype(jnp.float32)
    b1r = b1.reshape(1, H1).astype(jnp.float32)
    b2r = b2.reshape(1, H2).astype(jnp.float32)
    b3r = b3.reshape(1, 1).astype(jnp.float32)

    grid = (b_pad // tile_b, f_pad // tile_k)

    out = pl.pallas_call(
        discriminator_kernel,
        out_shape=jax.ShapeDtypeStruct((b_pad, 1), jnp.float32),
        grid_spec=pltpu.PrefetchScalarGridSpec(
            num_scalar_prefetch=0,
            grid=grid,
            in_specs=[
                pl.BlockSpec((tile_b, tile_k), lambda i, k: (i, k)),   # x
                pl.BlockSpec((tile_k, H1), lambda i, k: (k, 0)),       # W1
                pl.BlockSpec((1, H1), lambda i, k: (0, 0)),            # b1
                pl.BlockSpec((H1, H2), lambda i, k: (0, 0)),           # W2
                pl.BlockSpec((1, H2), lambda i, k: (0, 0)),            # b2
                pl.BlockSpec((1, H2), lambda i, k: (0, 0)),            # w3 row
                pl.BlockSpec((1, 1), lambda i, k: (0, 0)),             # b3
            ],
            out_specs=pl.BlockSpec((tile_b, 1), lambda i, k: (i, 0)),
            scratch_shapes=[pltpu.VMEM((tile_b, H1), jnp.float32)],
        ),
        compiler_params=pltpu.CompilerParams(
            # Batch tiles independent -> megacore-parallel on v7x; K is a
            # reduction -> arbitrary. Default scoped VMEM limit is ample for
            # these tile sizes on all of v5e/v6e/v7x.
            dimension_semantics=("parallel", "arbitrary")),
    )(x_bf, w1_bf, b1r, w2_bf, b2r, w3_row, b3r)

    return out[:B]


def init_params(key, n_features):
    """Mimics nn.Linear's U(-1/sqrt(fan_in), 1/sqrt(fan_in)) init.

    Weights are stored transposed: (in_features, out_features); biases (1, out).
    (In a real training loop the bf16 weight copies would be kept in HBM
    instead of re-cast per call.)"""
    dims = [(n_features, 512), (512, 256), (256, 1)]
    params = []
    for fan_in, fan_out in dims:
        key, kw, kb = jax.random.split(key, 3)
        bound = 1.0 / jnp.sqrt(jnp.float32(fan_in))
        w = jax.random.uniform(kw, (fan_in, fan_out), jnp.float32, -bound, bound)
        b = jax.random.uniform(kb, (1, fan_out), jnp.float32, -bound, bound)
        params += [w, b]
    return tuple(params)


def reference_forward(img, params):
    w1, b1, w2, b2, w3, b3 = params
    x = img.reshape(img.shape[0], -1).astype(jnp.float32)
    h1 = x @ w1 + b1
    h1 = jnp.where(h1 > 0, h1, 0.2 * h1)
    h2 = h1 @ w2 + b2
    h2 = jnp.where(h2 > 0, h2, 0.2 * h2)
    return jax.nn.sigmoid(h2 @ w3 + b3)


if __name__ == "__main__":
    # Small shapes consistent with the module: channels=4, img_size=16
    # -> n_features = 4 * 16 * 16 = 1024.
    B, C, H, W = 2, 4, 16, 16
    n_features = C * H * W

    key = jax.random.PRNGKey(0)
    key, kimg = jax.random.split(key)
    img = jax.random.normal(kimg, (B, C, H, W), jnp.float32)

    params = init_params(key, n_features)

    prob = jax.block_until_ready(discriminator_forward(img, params))
    ref = reference_forward(img, params)
    assert prob.shape == (B, 1), prob.shape
    # bf16 matmul operands with f32 accumulation: post-sigmoid outputs are
    # well within 2e-2 of the f32 reference at these scales.
    assert jnp.allclose(prob, ref, atol=2e-2), (prob, ref)

    # Also exercise the batch-tiled / padded path (grid over B).
    B2 = 300
    key, kimg2 = jax.random.split(key)
    img2 = jax.random.normal(kimg2, (B2, C, H, W), jnp.float32)
    prob2 = jax.block_until_ready(discriminator_forward(img2, params))
    ref2 = reference_forward(img2, params)
    assert prob2.shape == (B2, 1), prob2.shape
    assert jnp.allclose(prob2, ref2, atol=2e-2), float(jnp.max(jnp.abs(prob2 - ref2)))

    print("KERNEL_OK")
</pallas_src>

<mosaic_0001>
module attributes {stable_mosaic.version = 11 : i64} {
  func.func @discriminator_kernel(%arg0: i32, %arg1: i32, %arg2: memref<2x1024xbf16, #tpu.memory_space<vmem>>, %arg3: memref<1024x512xbf16, #tpu.memory_space<vmem>>, %arg4: memref<1x512xf32, #tpu.memory_space<vmem>>, %arg5: memref<512x256xbf16, #tpu.memory_space<vmem>>, %arg6: memref<1x256xf32, #tpu.memory_space<vmem>>, %arg7: memref<1x256xf32, #tpu.memory_space<vmem>>, %arg8: memref<1x1xf32, #tpu.memory_space<vmem>>, %arg9: memref<2x1xf32, #tpu.memory_space<vmem>>, %arg10: memref<2x512xf32, #tpu.memory_space<vmem>>) attributes {dimension_semantics = [#tpu.dimension_semantics<parallel>, #tpu.dimension_semantics<arbitrary>], iteration_bounds = array<i64: 1, 1>, scalar_prefetch = 0 : i64, scratch_operands = 1 : i64, tpu.core_type = #tpu.core_type<tc>, window_params = [{transform_indices = @transform_0, window_bounds = array<i64: 2, 1024>}, {transform_indices = @transform_1, window_bounds = array<i64: 1024, 512>}, {pipeline_mode = #tpu.pipeline_mode<synchronous>, transform_indices = @transform_2, window_bounds = array<i64: 1, 512>}, {pipeline_mode = #tpu.pipeline_mode<synchronous>, transform_indices = @transform_3, window_bounds = array<i64: 512, 256>}, {pipeline_mode = #tpu.pipeline_mode<synchronous>, transform_indices = @transform_4, window_bounds = array<i64: 1, 256>}, {pipeline_mode = #tpu.pipeline_mode<synchronous>, transform_indices = @transform_5, window_bounds = array<i64: 1, 256>}, {pipeline_mode = #tpu.pipeline_mode<synchronous>, transform_indices = @transform_6, window_bounds = array<i64: 1, 1>}, {transform_indices = @transform_7, window_bounds = array<i64: 2, 1>}]} {
    %c0_i32 = arith.constant 0 : i32
    %0 = arith.cmpi eq, %arg1, %c0_i32 : i32
    %1 = arith.extui %0 : i1 to i32
    %c0_i32_0 = arith.constant 0 : i32
    %2 = arith.cmpi ne, %1, %c0_i32_0 : i32
    scf.if %2 {
      %cst_10 = arith.constant 0.000000e+00 : f32
      %12 = vector.broadcast %cst_10 : f32 to vector<2x512xf32>
      %c0_11 = arith.constant 0 : index
      %c0_12 = arith.constant 0 : index
      %13 = vector.load %arg10[%c0_11, %c0_12] : memref<2x512xf32, #tpu.memory_space<vmem>>, vector<2x512xf32>
      tpu.vector_store %arg10[%c0_11, %c0_12], %12 {strides = array<i32>} : memref<2x512xf32, #tpu.memory_space<vmem>>, vector<2x512xf32>,
    } else {
    }
    %c0 = arith.constant 0 : index
    %c0_1 = arith.constant 0 : index
    %3 = vector.load %arg10[%c0, %c0_1] : memref<2x512xf32, #tpu.memory_space<vmem>>, vector<2x512xf32>
    %c0_2 = arith.constant 0 : index
    %c0_3 = arith.constant 0 : index
    %4 = vector.load %arg2[%c0_2, %c0_3] : memref<2x1024xbf16, #tpu.memory_space<vmem>>, vector<2x1024xbf16>
    %c0_4 = arith.constant 0 : index
    %c0_5 = arith.constant 0 : index
    %5 = vector.load %arg3[%c0_4, %c0_5] : memref<1024x512xbf16, #tpu.memory_space<vmem>>, vector<1024x512xbf16>
    %cst = arith.constant dense<0.000000e+00> : vector<2x512xf32>
    %6 = tpu.matmul %4, %5, %cst {dimension_numbers = #tpu.dot_dimension_numbers<[1], [0], [0], [1], [0, 0, 1, 1], [], []>} : vector<2x1024xbf16>, vector<1024x512xbf16>, vector<2x512xf32> -> vector<2x512xf32>
    %7 = arith.addf %3, %6 : vector<2x512xf32>
    %c0_6 = arith.constant 0 : index
    %c0_7 = arith.constant 0 : index
    %8 = vector.load %arg10[%c0_6, %c0_7] : memref<2x512xf32, #tpu.memory_space<vmem>>, vector<2x512xf32>
    tpu.vector_store %arg10[%c0_6, %c0_7], %7 {strides = array<i32>} : memref<2x512xf32, #tpu.memory_space<vmem>>, vector<2x512xf32>,
    %c0_i32_8 = arith.constant 0 : i32
    %9 = arith.cmpi eq, %arg1, %c0_i32_8 : i32
    %10 = arith.extui %9 : i1 to i32
    %c0_i32_9 = arith.constant 0 : i32
    %11 = arith.cmpi ne, %10, %c0_i32_9 : i32
    scf.if %11 {
      %c0_10 = arith.constant 0 : index
      %c0_11 = arith.constant 0 : index
      %12 = vector.load %arg10[%c0_10, %c0_11] : memref<2x512xf32, #tpu.memory_space<vmem>>, vector<2x512xf32>
      %c0_12 = arith.constant 0 : index
      %c0_13 = arith.constant 0 : index
      %13 = vector.load %arg4[%c0_12, %c0_13] : memref<1x512xf32, #tpu.memory_space<vmem>>, vector<1x512xf32>
      %14 = vector.broadcast %13 : vector<1x512xf32> to vector<2x512xf32>
      %15 = arith.addf %12, %14 : vector<2x512xf32>
      %cst_14 = arith.constant 0.000000e+00 : f32
      %16 = vector.broadcast %cst_14 : f32 to vector<2x512xf32>
      %17 = arith.cmpf ogt, %15, %16 : vector<2x512xf32>
      %cst_15 = arith.constant 2.000000e-01 : f32
      %18 = vector.broadcast %cst_15 : f32 to vector<2x512xf32>
      %19 = arith.mulf %18, %15 : vector<2x512xf32>
      %20 = arith.select %17, %15, %19 : vector<2x512xi1>, vector<2x512xf32>
      %21 = arith.truncf %20 : vector<2x512xf32> to vector<2x512xbf16>
      %c0_16 = arith.constant 0 : index
      %c0_17 = arith.constant 0 : index
      %22 = vector.load %arg5[%c0_16, %c0_17] : memref<512x256xbf16, #tpu.memory_space<vmem>>, vector<512x256xbf16>
      %cst_18 = arith.constant dense<0.000000e+00> : vector<2x256xf32>
      %23 = tpu.matmul %21, %22, %cst_18 {dimension_numbers = #tpu.dot_dimension_numbers<[1], [0], [0], [1], [0, 0, 1, 1], [], []>} : vector<2x512xbf16>, vector<512x256xbf16>, vector<2x256xf32> -> vector<2x256xf32>
      %c0_19 = arith.constant 0 : index
      %c0_20 = arith.constant 0 : index
      %24 = vector.load %arg6[%c0_19, %c0_20] : memref<1x256xf32, #tpu.memory_space<vmem>>, vector<1x256xf32>
      %25 = vector.broadcast %24 : vector<1x256xf32> to vector<2x256xf32>
      %26 = arith.addf %23, %25 : vector<2x256xf32>
      %cst_21 = arith.constant 0.000000e+00 : f32
      %27 = vector.broadcast %cst_21 : f32 to vector<2x256xf32>
      %28 = arith.cmpf ogt, %26, %27 : vector<2x256xf32>
      %cst_22 = arith.constant 2.000000e-01 : f32
      %29 = vector.broadcast %cst_22 : f32 to vector<2x256xf32>
      %30 = arith.mulf %29, %26 : vector<2x256xf32>
      %31 = arith.select %28, %26, %30 : vector<2x256xi1>, vector<2x256xf32>
      %c0_23 = arith.constant 0 : index
      %c0_24 = arith.constant 0 : index
      %32 = vector.load %arg7[%c0_23, %c0_24] : memref<1x256xf32, #tpu.memory_space<vmem>>, vector<1x256xf32>
      %33 = vector.broadcast %32 : vector<1x256xf32> to vector<2x256xf32>
      %34 = arith.mulf %31, %33 : vector<2x256xf32>
      %cst_25 = arith.constant dense<0.000000e+00> : vector<2xf32>
      %35 = vector.multi_reduction <add>, %34, %cst_25 [1] : vector<2x256xf32> to vector<2xf32>
      %36 = vector.shape_cast %35 : vector<2xf32> to vector<2x1xf32>
      %c0_26 = arith.constant 0 : index
      %c0_27 = arith.constant 0 : index
      %37 = vector.load %arg8[%c0_26, %c0_27] : memref<1x1xf32, #tpu.memory_space<vmem>>, vector<1x1xf32>
      %38 = vector.broadcast %37 : vector<1x1xf32> to vector<2x1xf32>
      %39 = arith.addf %36, %38 : vector<2x1xf32>
      %40 = arith.negf %39 : vector<2x1xf32>
      %41 = math.exp %40 : vector<2x1xf32>
      %cst_28 = arith.constant 1.000000e+00 : f32
      %42 = vector.broadcast %cst_28 : f32 to vector<2x1xf32>
      %43 = arith.addf %42, %41 : vector<2x1xf32>
      %44 = arith.divf %42, %43 : vector<2x1xf32>
      %c0_29 = arith.constant 0 : index
      %c0_30 = arith.constant 0 : index
      %45 = vector.load %arg9[%c0_29, %c0_30] : memref<2x1xf32, #tpu.memory_space<vmem>>, vector<2x1xf32>
      tpu.vector_store %arg9[%c0_29, %c0_30], %44 {strides = array<i32>} : memref<2x1xf32, #tpu.memory_space<vmem>>, vector<2x1xf32>,
    } else {
    }
    return
  }
  func.func @transform_0(%arg0: i32, %arg1: i32) -> (i32, i32) {
    %c0_i32 = arith.constant 0 : i32
    return %arg0, %arg1 : i32, i32
  }
  func.func @transform_1(%arg0: i32, %arg1: i32) -> (i32, i32) {
    %c0_i32 = arith.constant 0 : i32
    %c0_i32_0 = arith.constant 0 : i32
    return %arg1, %c0_i32 : i32, i32
  }
  func.func @transform_2(%arg0: i32, %arg1: i32) -> (i32, i32) {
    %c0_i32 = arith.constant 0 : i32
    %c0_i32_0 = arith.constant 0 : i32
    %c0_i32_1 = arith.constant 0 : i32
    return %c0_i32, %c0_i32_0 : i32, i32
  }
  func.func @transform_3(%arg0: i32, %arg1: i32) -> (i32, i32) {
    %c0_i32 = arith.constant 0 : i32
    %c0_i32_0 = arith.constant 0 : i32
    %c0_i32_1 = arith.constant 0 : i32
    return %c0_i32, %c0_i32_0 : i32, i32
  }
  func.func @transform_4(%arg0: i32, %arg1: i32) -> (i32, i32) {
    %c0_i32 = arith.constant 0 : i32
    %c0_i32_0 = arith.constant 0 : i32
    %c0_i32_1 = arith.constant 0 : i32
    return %c0_i32, %c0_i32_0 : i32, i32
  }
  func.func @transform_5(%arg0: i32, %arg1: i32) -> (i32, i32) {
    %c0_i32 = arith.constant 0 : i32
    %c0_i32_0 = arith.constant 0 : i32
    %c0_i32_1 = arith.constant 0 : i32
    return %c0_i32, %c0_i32_0 : i32, i32
  }
  func.func @transform_6(%arg0: i32, %arg1: i32) -> (i32, i32) {
    %c0_i32 = arith.constant 0 : i32
    %c0_i32_0 = arith.constant 0 : i32
    %c0_i32_1 = arith.constant 0 : i32
    return %c0_i32, %c0_i32_0 : i32, i32
  }
  func.func @transform_7(%arg0: i32, %arg1: i32) -> (i32, i32) {
    %c0_i32 = arith.constant 0 : i32
    %c0_i32_0 = arith.constant 0 : i32
    return %arg0, %c0_i32 : i32, i32
  }
}

</mosaic_0001>

<llo_original>
// kernel: tpu_custom_call.1
$region0: #{tpu_custom_call.1}
  #allocation0 [shape = 'u32[]', space=smem, size = 0x4, offset = 0x4, fixed_abs, tag = 'smem constant byte address 0x4 - core index']
  #allocation1 [shape = 'u32[72,128]{1,0:T(1,128)}', space=vmem, size = 0x9000, scoped, tag = 'internal scratch']
  #allocation2 [shape = 'f32[2,512]{1,0:T(2,128)}', space=vmem, size = 0x1000, scoped, tag = 'scratch operand']
  #allocation3 [shape = 'f32[1,1]{1,0:T(1,128)S(1)}', space=vmem, size = 0x200, scoped, tag = 'scoped memory for tpu_custom_call.1']
  %s0 = inlined_call_operand.hbm [shape: bf16[2,1024], index: 0, kind: input, shape index: {}]
  %s1 = inlined_call_operand.hbm [shape: bf16[1024,512], index: 1, kind: input, shape index: {}]
  %s2 = inlined_call_operand.hbm [shape: f32[1,512], index: 2, kind: input, shape index: {}]
  %s3 = inlined_call_operand.hbm [shape: bf16[512,256], index: 3, kind: input, shape index: {}]
  %s4 = inlined_call_operand.vmem [shape: f32[1,256], index: 4, kind: input, shape index: {}]
  %s5 = inlined_call_operand.vmem [shape: f32[1,256], index: 5, kind: input, shape index: {}]
  %s6 = inlined_call_operand.<no memory space> [shape: f32[1,1], index: 6, kind: input, shape index: {}]
  %s7 = inlined_call_operand.vmem [shape: f32[2,1], index: 7, kind: output, shape index: {}]
  %s8 = sld [smem:[#allocation0]]
  $region62: #{tpu_custom_call.1} parent=0
    _
  %s10 = ssub.s32 1, %s8
  %s11 = scalar_select 0, %s10, %s8
  %v12 = vstv %s6
  %13 = vst [vmem:[#allocation3] sm:$0x1] %v12
  $region1: #{tpu_custom_call.1} parent=0
    #allocation4 [shape = 'u8[4096]{0}', space=vmem, size = 0x1000, scoped, tag = 'input window, operand 0, single buffered']
    #allocation5 [shape = 's32[1]{0}', space=sflag, size = 0x4, scoped, tag = 'scoped memory for tpu_custom_call.1']
    #allocation6 [shape = 'u8[1048576]{0}', space=vmem, size = 0x100000, scoped, tag = 'input window, operand 1, single buffered']
    #allocation7 [shape = 's32[1]{0}', space=sflag, size = 0x4, scoped, tag = 'scoped memory for tpu_custom_call.1']
    #allocation8 [shape = 'u8[2048]{0}', space=vmem, size = 0x800, scoped, tag = 'input window, operand 2, single buffered']
    #allocation9 [shape = 'u8[262144]{0}', space=vmem, size = 0x40000, scoped, tag = 'input window, operand 3, single buffered']
    #allocation10 [shape = 's32[1]{0}', space=sflag, size = 0x4, scoped, tag = 'scoped memory for tpu_custom_call.1']
    %14 = vsyncpa [#allocation5], 0
    %15 = vsyncpa [#allocation7], 0
    %16 = vsyncpa [#allocation10], 0
    // Predicated region
    $region2: #{tpu_custom_call.1} parent=1 // pred_check
      _
    $region3: #{tpu_custom_call.1} parent=1 // pred_check_branch
      %18 = sbr.rel (0) target = $region5
    $region4: #{tpu_custom_call.1} parent=1 // pred_region
      %20 = vsyncadd [#allocation5], 0
      %s22 = sshll.u32 %s0, 4
      %s23 = int_to_ptr.hbm [resolvable:$true] %s22
      %s24 = sshll.u32 [#allocation4], 4
      %s25 = int_to_ptr.vmem [resolvable:$true] %s24
      %27 = dma.hbm_to_vmem [thread:$0]  %s23, 128, %s25, [#allocation5]
    $region5: #{tpu_custom_call.1} parent=1 // pred_fallthru
      _
    // Predicated region
    $region6: #{tpu_custom_call.1} parent=1 // pred_check
      _
    $region7: #{tpu_custom_call.1} parent=1 // pred_check_branch
      %29 = sbr.rel (0) target = $region9
    $region8: #{tpu_custom_call.1} parent=1 // pred_region
      %31 = vsyncadd [#allocation7], 0
      %s32 = sshll.u32 %s1, 4
      %s33 = int_to_ptr.hbm [resolvable:$true] %s32
      %s34 = sshll.u32 [#allocation6], 4
      %s35 = int_to_ptr.vmem [resolvable:$true] %s34
      %40 = dma.hbm_to_vmem [thread:$0]  %s33, 32768, %s35, [#allocation7], 256, 256, 16
    $region9: #{tpu_custom_call.1} parent=1 // pred_fallthru
      _
    // Predicated region
    $region10: #{tpu_custom_call.1} parent=1 // pred_check
      _
    $region11: #{tpu_custom_call.1} parent=1 // pred_check_branch
      %42 = sbr.rel (0) target = $region13
    $region12: #{tpu_custom_call.1} parent=1 // pred_region
      %44 = vsyncadd [#allocation7], 0
      %s46 = sshll.u32 %s2, 4
      %s47 = int_to_ptr.hbm [resolvable:$true] %s46
      %s48 = sshll.u32 [#allocation8], 4
      %s49 = int_to_ptr.vmem [resolvable:$true] %s48
      %51 = dma.hbm_to_vmem [thread:$0]  %s47, 64, %s49, [#allocation7]
    $region13: #{tpu_custom_call.1} parent=1 // pred_fallthru
      _
    // Predicated region
    $region14: #{tpu_custom_call.1} parent=1 // pred_check
      _
    $region15: #{tpu_custom_call.1} parent=1 // pred_check_branch
      %53 = sbr.rel (0) target = $region17
    $region16: #{tpu_custom_call.1} parent=1 // pred_region
      %55 = vsyncadd [#allocation10], 0
      %s56 = sshll.u32 %s3, 4
      %s57 = int_to_ptr.hbm [resolvable:$true] %s56
      %s58 = sshll.u32 [#allocation9], 4
      %s59 = int_to_ptr.vmem [resolvable:$true] %s58
      %64 = dma.hbm_to_vmem [thread:$0]  %s57, 8192, %s59, [#allocation10], 128, 128, 8
    $region17: #{tpu_custom_call.1} parent=1 // pred_fallthru
      _
    // Predicated region
    $region18: #{tpu_custom_call.1} parent=1 // pred_check
      _
    $region19: #{tpu_custom_call.1} parent=1 // pred_check_branch
      %66 = sbr.rel (0) target = $region21
    $region20: #{tpu_custom_call.1} parent=1 // pred_region
      _
    $region21: #{tpu_custom_call.1} parent=1 // pred_fallthru
      _
    // Predicated region
    $region22: #{tpu_custom_call.1} parent=1 // pred_check
      _
    $region23: #{tpu_custom_call.1} parent=1 // pred_check_branch
      %68 = sbr.rel (0) target = $region25
    $region24: #{tpu_custom_call.1} parent=1 // pred_region
      _
    $region25: #{tpu_custom_call.1} parent=1 // pred_fallthru
      _
    // Predicated region
    $region26: #{tpu_custom_call.1} parent=1 // pred_check
      _
    $region27: #{tpu_custom_call.1} parent=1 // pred_check_branch
      %70 = sbr.rel (0) target = $region29
    $region28: #{tpu_custom_call.1} parent=1 // pred_region
      _
    $region29: #{tpu_custom_call.1} parent=1 // pred_fallthru
      _
    // Predicated region
    $region30: #{tpu_custom_call.1} parent=1 // pred_check
      _
    $region31: #{tpu_custom_call.1} parent=1 // pred_check_branch
      %72 = sbr.rel (0) target = $region33
    $region32: #{tpu_custom_call.1} parent=1 // pred_region
      %74 = dma.done [#allocation5], 128
    $region33: #{tpu_custom_call.1} parent=1 // pred_fallthru
      _
    // Predicated region
    $region34: #{tpu_custom_call.1} parent=1 // pred_check
      _
    $region35: #{tpu_custom_call.1} parent=1 // pred_check_branch
      %76 = sbr.rel (0) target = $region37
    $region36: #{tpu_custom_call.1} parent=1 // pred_region
      %78 = dma.done [#allocation7], 32768
    $region37: #{tpu_custom_call.1} parent=1 // pred_fallthru
      _
    // Predicated region
    $region38: #{tpu_custom_call.1} parent=1 // pred_check
      _
    $region39: #{tpu_custom_call.1} parent=1 // pred_check_branch
      %80 = sbr.rel (0) target = $region41
    $region40: #{tpu_custom_call.1} parent=1 // pred_region
      %82 = dma.done [#allocation7], 64
    $region41: #{tpu_custom_call.1} parent=1 // pred_fallthru
      _
    // Predicated region
    $region42: #{tpu_custom_call.1} parent=1 // pred_check
      _
    $region43: #{tpu_custom_call.1} parent=1 // pred_check_branch
      %84 = sbr.rel (0) target = $region45
    $region44: #{tpu_custom_call.1} parent=1 // pred_region
      %86 = dma.done [#allocation10], 8192
    $region45: #{tpu_custom_call.1} parent=1 // pred_fallthru
      _
    %p87 = scmp.eq.s32.totalorder 0, 0
    // Predicated region
    $region46: #{tpu_custom_call.1} parent=1 // pred_check
      %p88 = pneg %p87
    $region47: #{tpu_custom_call.1} parent=1 // pred_check_branch
      %90 = sbr.rel (%p88) target = $region49
    $region48: #{tpu_custom_call.1} parent=1 // pred_region
      %91 = vst [vmem:[#allocation2] sm:$0xff] 0.0
    $region49: #{tpu_custom_call.1} parent=1 // pred_fallthru
      _
    %v92 = vld [vmem:[#allocation2] sm:$0xff]
    %v93 = vld [vmem:[#allocation4] sm:$0xff]
    %v94 = vld [vmem:[#allocation6] sm:$0xff]
    %v95 = vld [vmem:[#allocation6 + $0x8] sm:$0xff]
    %v96 = vld [vmem:[#allocation6 + $0x10] sm:$0xff]
    %v97 = vld [vmem:[#allocation6 + $0x18] sm:$0xff]
    %v98 = vld [vmem:[#allocation6 + $0x20] sm:$0xff]
    %v99 = vld [vmem:[#allocation6 + $0x28] sm:$0xff]
    %v100 = vld [vmem:[#allocation6 + $0x30] sm:$0xff]
    %v101 = vld [vmem:[#allocation6 + $0x38] sm:$0xff]
    %v102 = vld [vmem:[#allocation6 + $0x40] sm:$0xff]
    %v103 = vld [vmem:[#allocation6 + $0x48] sm:$0xff]
    %v104 = vld [vmem:[#allocation6 + $0x50] sm:$0xff]
    %v105 = vld [vmem:[#allocation6 + $0x58] sm:$0xff]
    %v106 = vld [vmem:[#allocation6 + $0x60] sm:$0xff]
    %v107 = vld [vmem:[#allocation6 + $0x68] sm:$0xff]
    %v108 = vld [vmem:[#allocation6 + $0x70] sm:$0xff]
    %v109 = vld [vmem:[#allocation6 + $0x78] sm:$0xff]
    %v110 = vld [vmem:[#allocation6 + $0x80] sm:$0xff]
    %v111 = vld [vmem:[#allocation6 + $0x88] sm:$0xff]
    %v112 = vld [vmem:[#allocation6 + $0x90] sm:$0xff]
    %v113 = vld [vmem:[#allocation6 + $0x98] sm:$0xff]
    %v114 = vld [vmem:[#allocation6 + $0xa0] sm:$0xff]
    %v115 = vld [vmem:[#allocation6 + $0xa8] sm:$0xff]
    %v116 = vld [vmem:[#allocation6 + $0xb0] sm:$0xff]
    %v117 = vld [vmem:[#allocation6 + $0xb8] sm:$0xff]
    %v118 = vld [vmem:[#allocation6 + $0xc0] sm:$0xff]
    %v119 = vld [vmem:[#allocation6 + $0xc8] sm:$0xff]
    %v120 = vld [vmem:[#allocation6 + $0xd0] sm:$0xff]
    %v121 = vld [vmem:[#allocation6 + $0xd8] sm:$0xff]
    %v122 = vld [vmem:[#allocation6 + $0xe0] sm:$0xff]
    %v123 = vld [vmem:[#allocation6 + $0xe8] sm:$0xff]
    %v124 = vld [vmem:[#allocation6 + $0xf0] sm:$0xff]
    %v125 = vld [vmem:[#allocation6 + $0xf8] sm:$0xff]
    %v126 = vld [vmem:[#allocation6 + $0x100] sm:$0xff]
    %v127 = vld [vmem:[#allocation6 + $0x108] sm:$0xff]
    %v128 = vld [vmem:[#allocation6 + $0x110] sm:$0xff]
    %v129 = vld [vmem:[#allocation6 + $0x118] sm:$0xff]
    %v130 = vld [vmem:[#allocation6 + $0x120] sm:$0xff]
    %v131 = vld [vmem:[#allocation6 + $0x128] sm:$0xff]
    %v132 = vld [vmem:[#allocation6 + $0x130] sm:$0xff]
    %v133 = vld [vmem:[#allocation6 + $0x138] sm:$0xff]
    %v134 = vld [vmem:[#allocation6 + $0x140] sm:$0xff]
    %v135 = vld [vmem:[#allocation6 + $0x148] sm:$0xff]
    %v136 = vld [vmem:[#allocation6 + $0x150] sm:$0xff]
    %v137 = vld [vmem:[#allocation6 + $0x158] sm:$0xff]
    %v138 = vld [vmem:[#allocation6 + $0x160] sm:$0xff]
    %v139 = vld [vmem:[#allocation6 + $0x168] sm:$0xff]
    %v140 = vld [vmem:[#allocation6 + $0x170] sm:$0xff]
    %v141 = vld [vmem:[#allocation6 + $0x178] sm:$0xff]
    %v142 = vld [vmem:[#allocation6 + $0x180] sm:$0xff]
    %v143 = vld [vmem:[#allocation6 + $0x188] sm:$0xff]
    %v144 = vld [vmem:[#allocation6 + $0x190] sm:$0xff]
    %v145 = vld [vmem:[#allocation6 + $0x198] sm:$0xff]
    %v146 = vld [vmem:[#allocation6 + $0x1a0] sm:$0xff]
    %v147 = vld [vmem:[#allocation6 + $0x1a8] sm:$0xff]
    %v148 = vld [vmem:[#allocation6 + $0x1b0] sm:$0xff]
    %v149 = vld [vmem:[#allocation6 + $0x1b8] sm:$0xff]
    %v150 = vld [vmem:[#allocation6 + $0x1c0] sm:$0xff]
    %v151 = vld [vmem:[#allocation6 + $0x1c8] sm:$0xff]
    %v152 = vld [vmem:[#allocation6 + $0x1d0] sm:$0xff]
    %v153 = vld [vmem:[#allocation6 + $0x1d8] sm:$0xff]
    %v154 = vld [vmem:[#allocation6 + $0x1e0] sm:$0xff]
    %v155 = vld [vmem:[#allocation6 + $0x1e8] sm:$0xff]
    %v156 = vld [vmem:[#allocation6 + $0x1f0] sm:$0xff]
    %v157 = vld [vmem:[#allocation6 + $0x1f8] sm:$0xff]
    %v158 = vld [vmem:[#allocation6 + $0x200] sm:$0xff]
    %v159 = vld [vmem:[#allocation6 + $0x208] sm:$0xff]
    %v160 = vld [vmem:[#allocation6 + $0x210] sm:$0xff]
    %v161 = vld [vmem:[#allocation6 + $0x218] sm:$0xff]
    %v162 = vld [vmem:[#allocation6 + $0x220] sm:$0xff]
    %v163 = vld [vmem:[#allocation6 + $0x228] sm:$0xff]
    %v164 = vld [vmem:[#allocation6 + $0x230] sm:$0xff]
    %v165 = vld [vmem:[#allocation6 + $0x238] sm:$0xff]
    %v166 = vld [vmem:[#allocation6 + $0x240] sm:$0xff]
    %v167 = vld [vmem:[#allocation6 + $0x248] sm:$0xff]
    %v168 = vld [vmem:[#allocation6 + $0x250] sm:$0xff]
    %v169 = vld [vmem:[#allocation6 + $0x258] sm:$0xff]
    %v170 = vld [vmem:[#allocation6 + $0x260] sm:$0xff]
    %v171 = vld [vmem:[#allocation6 + $0x268] sm:$0xff]
    %v172 = vld [vmem:[#allocation6 + $0x270] sm:$0xff]
    %v173 = vld [vmem:[#allocation6 + $0x278] sm:$0xff]
    %v174 = vld [vmem:[#allocation6 + $0x280] sm:$0xff]
    %v175 = vld [vmem:[#allocation6 + $0x288] sm:$0xff]
    %v176 = vld [vmem:[#allocation6 + $0x290] sm:$0xff]
    %v177 = vld [vmem:[#allocation6 + $0x298] sm:$0xff]
    %v178 = vld [vmem:[#allocation6 + $0x2a0] sm:$0xff]
    %v179 = vld [vmem:[#allocation6 + $0x2a8] sm:$0xff]
    %v180 = vld [vmem:[#allocation6 + $0x2b0] sm:$0xff]
    %v181 = vld [vmem:[#allocation6 + $0x2b8] sm:$0xff]
    %v182 = vld [vmem:[#allocation6 + $0x2c0] sm:$0xff]
    %v183 = vld [vmem:[#allocation6 + $0x2c8] sm:$0xff]
    %v184 = vld [vmem:[#allocation6 + $0x2d0] sm:$0xff]
    %v185 = vld [vmem:[#allocation6 + $0x2d8] sm:$0xff]
    %v186 = vld [vmem:[#allocation6 + $0x2e0] sm:$0xff]
    %v187 = vld [vmem:[#allocation6 + $0x2e8] sm:$0xff]
    %v188 = vld [vmem:[#allocation6 + $0x2f0] sm:$0xff]
    %v189 = vld [vmem:[#allocation6 + $0x2f8] sm:$0xff]
    %v190 = vld [vmem:[#allocation6 + $0x300] sm:$0xff]
    %v191 = vld [vmem:[#allocation6 + $0x308] sm:$0xff]
    %v192 = vld [vmem:[#allocation6 + $0x310] sm:$0xff]
    %v193 = vld [vmem:[#allocation6 + $0x318] sm:$0xff]
    %v194 = vld [vmem:[#allocation6 + $0x320] sm:$0xff]
    %v195 = vld [vmem:[#allocation6 + $0x328] sm:$0xff]
    %v196 = vld [vmem:[#allocation6 + $0x330] sm:$0xff]
    %v197 = vld [vmem:[#allocation6 + $0x338] sm:$0xff]
    %v198 = vld [vmem:[#allocation6 + $0x340] sm:$0xff]
    %v199 = vld [vmem:[#allocation6 + $0x348] sm:$0xff]
    %v200 = vld [vmem:[#allocation6 + $0x350] sm:$0xff]
    %v201 = vld [vmem:[#allocation6 + $0x358] sm:$0xff]
    %v202 = vld [vmem:[#allocation6 + $0x360] sm:$0xff]
    %v203 = vld [vmem:[#allocation6 + $0x368] sm:$0xff]
    %v204 = vld [vmem:[#allocation6 + $0x370] sm:$0xff]
    %v205 = vld [vmem:[#allocation6 + $0x378] sm:$0xff]
    %v206 = vld [vmem:[#allocation6 + $0x380] sm:$0xff]
    %v207 = vld [vmem:[#allocation6 + $0x388] sm:$0xff]
    %v208 = vld [vmem:[#allocation6 + $0x390] sm:$0xff]
    %v209 = vld [vmem:[#allocation6 + $0x398] sm:$0xff]
    %v210 = vld [vmem:[#allocation6 + $0x3a0] sm:$0xff]
    %v211 = vld [vmem:[#allocation6 + $0x3a8] sm:$0xff]
    %v212 = vld [vmem:[#allocation6 + $0x3b0] sm:$0xff]
    %v213 = vld [vmem:[#allocation6 + $0x3b8] sm:$0xff]
    %v214 = vld [vmem:[#allocation6 + $0x3c0] sm:$0xff]
    %v215 = vld [vmem:[#allocation6 + $0x3c8] sm:$0xff]
    %v216 = vld [vmem:[#allocation6 + $0x3d0] sm:$0xff]
    %v217 = vld [vmem:[#allocation6 + $0x3d8] sm:$0xff]
    %v218 = vld [vmem:[#allocation6 + $0x3e0] sm:$0xff]
    %v219 = vld [vmem:[#allocation6 + $0x3e8] sm:$0xff]
    %v220 = vld [vmem:[#allocation6 + $0x3f0] sm:$0xff]
    %v221 = vld [vmem:[#allocation6 + $0x3f8] sm:$0xff]
    %v222 = vld [vmem:[#allocation6 + $0x400] sm:$0xff]
    %v223 = vld [vmem:[#allocation6 + $0x408] sm:$0xff]
    %v224 = vld [vmem:[#allocation6 + $0x410] sm:$0xff]
    %v225 = vld [vmem:[#allocation6 + $0x418] sm:$0xff]
    %v226 = vld [vmem:[#allocation6 + $0x420] sm:$0xff]
    %v227 = vld [vmem:[#allocation6 + $0x428] sm:$0xff]
    %v228 = vld [vmem:[#allocation6 + $0x430] sm:$0xff]
    %v229 = vld [vmem:[#allocation6 + $0x438] sm:$0xff]
    %v230 = vld [vmem:[#allocation6 + $0x440] sm:$0xff]
    %v231 = vld [vmem:[#allocation6 + $0x448] sm:$0xff]
    %v232 = vld [vmem:[#allocation6 + $0x450] sm:$0xff]
    %v233 = vld [vmem:[#allocation6 + $0x458] sm:$0xff]
    %v234 = vld [vmem:[#allocation6 + $0x460] sm:$0xff]
    %v235 = vld [vmem:[#allocation6 + $0x468] sm:$0xff]
    %v236 = vld [vmem:[#allocation6 + $0x470] sm:$0xff]
    %v237 = vld [vmem:[#allocation6 + $0x478] sm:$0xff]
    %v238 = vld [vmem:[#allocation6 + $0x480] sm:$0xff]
    %v239 = vld [vmem:[#allocation6 + $0x488] sm:$0xff]
    %v240 = vld [vmem:[#allocation6 + $0x490] sm:$0xff]
    %v241 = vld [vmem:[#allocation6 + $0x498] sm:$0xff]
    %v242 = vld [vmem:[#allocation6 + $0x4a0] sm:$0xff]
    %v243 = vld [vmem:[#allocation6 + $0x4a8] sm:$0xff]
    %v244 = vld [vmem:[#allocation6 + $0x4b0] sm:$0xff]
    %v245 = vld [vmem:[#allocation6 + $0x4b8] sm:$0xff]
    %v246 = vld [vmem:[#allocation6 + $0x4c0] sm:$0xff]
    %v247 = vld [vmem:[#allocation6 + $0x4c8] sm:$0xff]
    %v248 = vld [vmem:[#allocation6 + $0x4d0] sm:$0xff]
    %v249 = vld [vmem:[#allocation6 + $0x4d8] sm:$0xff]
    %v250 = vld [vmem:[#allocation6 + $0x4e0] sm:$0xff]
    %v251 = vld [vmem:[#allocation6 + $0x4e8] sm:$0xff]
    %v252 = vld [vmem:[#allocation6 + $0x4f0] sm:$0xff]
    %v253 = vld [vmem:[#allocation6 + $0x4f8] sm:$0xff]
    %v254 = vld [vmem:[#allocation6 + $0x500] sm:$0xff]
    %v255 = vld [vmem:[#allocation6 + $0x508] sm:$0xff]
    %v256 = vld [vmem:[#allocation6 + $0x510] sm:$0xff]
    %v257 = vld [vmem:[#allocation6 + $0x518] sm:$0xff]
    %v258 = vld [vmem:[#allocation6 + $0x520] sm:$0xff]
    %v259 = vld [vmem:[#allocation6 + $0x528] sm:$0xff]
    %v260 = vld [vmem:[#allocation6 + $0x530] sm:$0xff]
    %v261 = vld [vmem:[#allocation6 + $0x538] sm:$0xff]
    %v262 = vld [vmem:[#allocation6 + $0x540] sm:$0xff]
    %v263 = vld [vmem:[#allocation6 + $0x548] sm:$0xff]
    %v264 = vld [vmem:[#allocation6 + $0x550] sm:$0xff]
    %v265 = vld [vmem:[#allocation6 + $0x558] sm:$0xff]
    %v266 = vld [vmem:[#allocation6 + $0x560] sm:$0xff]
    %v267 = vld [vmem:[#allocation6 + $0x568] sm:$0xff]
    %v268 = vld [vmem:[#allocation6 + $0x570] sm:$0xff]
    %v269 = vld [vmem:[#allocation6 + $0x578] sm:$0xff]
    %v270 = vld [vmem:[#allocation6 + $0x580] sm:$0xff]
    %v271 = vld [vmem:[#allocation6 + $0x588] sm:$0xff]
    %v272 = vld [vmem:[#allocation6 + $0x590] sm:$0xff]
    %v273 = vld [vmem:[#allocation6 + $0x598] sm:$0xff]
    %v274 = vld [vmem:[#allocation6 + $0x5a0] sm:$0xff]
    %v275 = vld [vmem:[#allocation6 + $0x5a8] sm:$0xff]
    %v276 = vld [vmem:[#allocation6 + $0x5b0] sm:$0xff]
    %v277 = vld [vmem:[#allocation6 + $0x5b8] sm:$0xff]
    %v278 = vld [vmem:[#allocation6 + $0x5c0] sm:$0xff]
    %v279 = vld [vmem:[#allocation6 + $0x5c8] sm:$0xff]
    %v280 = vld [vmem:[#allocation6 + $0x5d0] sm:$0xff]
    %v281 = vld [vmem:[#allocation6 + $0x5d8] sm:$0xff]
    %v282 = vld [vmem:[#allocation6 + $0x5e0] sm:$0xff]
    %v283 = vld [vmem:[#allocation6 + $0x5e8] sm:$0xff]
    %v284 = vld [vmem:[#allocation6 + $0x5f0] sm:$0xff]
    %v285 = vld [vmem:[#allocation6 + $0x5f8] sm:$0xff]
    %v286 = vld [vmem:[#allocation6 + $0x600] sm:$0xff]
    %v287 = vld [vmem:[#allocation6 + $0x608] sm:$0xff]
    %v288 = vld [vmem:[#allocation6 + $0x610] sm:$0xff]
    %v289 = vld [vmem:[#allocation6 + $0x618] sm:$0xff]
    %v290 = vld [vmem:[#allocation6 + $0x620] sm:$0xff]
    %v291 = vld [vmem:[#allocation6 + $0x628] sm:$0xff]
    %v292 = vld [vmem:[#allocation6 + $0x630] sm:$0xff]
    %v293 = vld [vmem:[#allocation6 + $0x638] sm:$0xff]
    %v294 = vld [vmem:[#allocation6 + $0x640] sm:$0xff]
    %v295 = vld [vmem:[#allocation6 + $0x648] sm:$0xff]
    %v296 = vld [vmem:[#allocation6 + $0x650] sm:$0xff]
    %v297 = vld [vmem:[#allocation6 + $0x658] sm:$0xff]
    %v298 = vld [vmem:[#allocation6 + $0x660] sm:$0xff]
    %v299 = vld [vmem:[#allocation6 + $0x668] sm:$0xff]
    %v300 = vld [vmem:[#allocation6 + $0x670] sm:$0xff]
    %v301 = vld [vmem:[#allocation6 + $0x678] sm:$0xff]
    %v302 = vld [vmem:[#allocation6 + $0x680] sm:$0xff]
    %v303 = vld [vmem:[#allocation6 + $0x688] sm:$0xff]
    %v304 = vld [vmem:[#allocation6 + $0x690] sm:$0xff]
    %v305 = vld [vmem:[#allocation6 + $0x698] sm:$0xff]
    %v306 = vld [vmem:[#allocation6 + $0x6a0] sm:$0xff]
    %v307 = vld [vmem:[#allocation6 + $0x6a8] sm:$0xff]
    %v308 = vld [vmem:[#allocation6 + $0x6b0] sm:$0xff]
    %v309 = vld [vmem:[#allocation6 + $0x6b8] sm:$0xff]
    %v310 = vld [vmem:[#allocation6 + $0x6c0] sm:$0xff]
    %v311 = vld [vmem:[#allocation6 + $0x6c8] sm:$0xff]
    %v312 = vld [vmem:[#allocation6 + $0x6d0] sm:$0xff]
    %v313 = vld [vmem:[#allocation6 + $0x6d8] sm:$0xff]
    %v314 = vld [vmem:[#allocation6 + $0x6e0] sm:$0xff]
    %v315 = vld [vmem:[#allocation6 + $0x6e8] sm:$0xff]
    %v316 = vld [vmem:[#allocation6 + $0x6f0] sm:$0xff]
    %v317 = vld [vmem:[#allocation6 + $0x6f8] sm:$0xff]
    %v318 = vld [vmem:[#allocation6 + $0x700] sm:$0xff]
    %v319 = vld [vmem:[#allocation6 + $0x708] sm:$0xff]
    %v320 = vld [vmem:[#allocation6 + $0x710] sm:$0xff]
    %v321 = vld [vmem:[#allocation6 + $0x718] sm:$0xff]
    %v322 = vld [vmem:[#allocation6 + $0x720] sm:$0xff]
    %v323 = vld [vmem:[#allocation6 + $0x728] sm:$0xff]
    %v324 = vld [vmem:[#allocation6 + $0x730] sm:$0xff]
    %v325 = vld [vmem:[#allocation6 + $0x738] sm:$0xff]
    %v326 = vld [vmem:[#allocation6 + $0x740] sm:$0xff]
    %v327 = vld [vmem:[#allocation6 + $0x748] sm:$0xff]
    %v328 = vld [vmem:[#allocation6 + $0x750] sm:$0xff]
    %v329 = vld [vmem:[#allocation6 + $0x758] sm:$0xff]
    %v330 = vld [vmem:[#allocation6 + $0x760] sm:$0xff]
    %v331 = vld [vmem:[#allocation6 + $0x768] sm:$0xff]
    %v332 = vld [vmem:[#allocation6 + $0x770] sm:$0xff]
    %v333 = vld [vmem:[#allocation6 + $0x778] sm:$0xff]
    %v334 = vld [vmem:[#allocation6 + $0x780] sm:$0xff]
    %v335 = vld [vmem:[#allocation6 + $0x788] sm:$0xff]
    %v336 = vld [vmem:[#allocation6 + $0x790] sm:$0xff]
    %v337 = vld [vmem:[#allocation6 + $0x798] sm:$0xff]
    %v338 = vld [vmem:[#allocation6 + $0x7a0] sm:$0xff]
    %v339 = vld [vmem:[#allocation6 + $0x7a8] sm:$0xff]
    %v340 = vld [vmem:[#allocation6 + $0x7b0] sm:$0xff]
    %v341 = vld [vmem:[#allocation6 + $0x7b8] sm:$0xff]
    %v342 = vld [vmem:[#allocation6 + $0x7c0] sm:$0xff]
    %v343 = vld [vmem:[#allocation6 + $0x7c8] sm:$0xff]
    %v344 = vld [vmem:[#allocation6 + $0x7d0] sm:$0xff]
    %v345 = vld [vmem:[#allocation6 + $0x7d8] sm:$0xff]
    %v346 = vld [vmem:[#allocation6 + $0x7e0] sm:$0xff]
    %v347 = vld [vmem:[#allocation6 + $0x7e8] sm:$0xff]
    %v348 = vld [vmem:[#allocation6 + $0x7f0] sm:$0xff]
    %v349 = vld [vmem:[#allocation6 + $0x7f8] sm:$0xff]
    %351 = vst [vmem:[#allocation1] ss:$9 sm:$0xff] %v93
    %v352 = vld [vmem:[#allocation1] sm:$0xff]
    %v353 = vld [vmem:[#allocation1 + $0x9] sm:$0xff]
    %v354 = vld [vmem:[#allocation1 + $0x12] sm:$0xff]
    %v355 = vld [vmem:[#allocation1 + $0x1b] sm:$0xff]
    %v356 = vld [vmem:[#allocation1 + $0x24] sm:$0xff]
    %v357 = vld [vmem:[#allocation1 + $0x2d] sm:$0xff]
    %v358 = vld [vmem:[#allocation1 + $0x36] sm:$0xff]
    %v359 = vld [vmem:[#allocation1 + $0x3f] sm:$0xff]
    %v624 = vunpack.c.l.b16 %v94
    %v625 = vunpack.c.h.b16 %v94
    %v626 = vunpack.c.l.b16 %v95
    %v627 = vunpack.c.h.b16 %v95
    %v628 = vunpack.c.l.b16 %v96
    %v629 = vunpack.c.h.b16 %v96
    %v630 = vunpack.c.l.b16 %v97
    %v631 = vunpack.c.h.b16 %v97
    %v632 = vunpack.c.l.b16 %v98
    %v633 = vunpack.c.h.b16 %v98
    %v634 = vunpack.c.l.b16 %v99
    %v635 = vunpack.c.h.b16 %v99
    %v636 = vunpack.c.l.b16 %v100
    %v637 = vunpack.c.h.b16 %v100
    %v638 = vunpack.c.l.b16 %v101
    %v639 = vunpack.c.h.b16 %v101
    %v640 = vunpack.c.l.b16 %v102
    %v641 = vunpack.c.h.b16 %v102
    %v642 = vunpack.c.l.b16 %v103
    %v643 = vunpack.c.h.b16 %v103
    %v644 = vunpack.c.l.b16 %v104
    %v645 = vunpack.c.h.b16 %v104
    %v646 = vunpack.c.l.b16 %v105
    %v647 = vunpack.c.h.b16 %v105
    %v648 = vunpack.c.l.b16 %v106
    %v649 = vunpack.c.h.b16 %v106
    %v650 = vunpack.c.l.b16 %v107
    %v651 = vunpack.c.h.b16 %v107
    %v652 = vunpack.c.l.b16 %v108
    %v653 = vunpack.c.h.b16 %v108
    %v654 = vunpack.c.l.b16 %v109
    %v655 = vunpack.c.h.b16 %v109
    %v656 = vunpack.c.l.b16 %v110
    %v657 = vunpack.c.h.b16 %v110
    %v658 = vunpack.c.l.b16 %v111
    %v659 = vunpack.c.h.b16 %v111
    %v660 = vunpack.c.l.b16 %v112
    %v661 = vunpack.c.h.b16 %v112
    %v662 = vunpack.c.l.b16 %v113
    %v663 = vunpack.c.h.b16 %v113
    %v664 = vunpack.c.l.b16 %v114
    %v665 = vunpack.c.h.b16 %v114
    %v666 = vunpack.c.l.b16 %v115
    %v667 = vunpack.c.h.b16 %v115
    %v668 = vunpack.c.l.b16 %v116
    %v669 = vunpack.c.h.b16 %v116
    %v670 = vunpack.c.l.b16 %v117
    %v671 = vunpack.c.h.b16 %v117
    %v672 = vunpack.c.l.b16 %v118
    %v673 = vunpack.c.h.b16 %v118
    %v674 = vunpack.c.l.b16 %v119
    %v675 = vunpack.c.h.b16 %v119
    %v676 = vunpack.c.l.b16 %v120
    %v677 = vunpack.c.h.b16 %v120
    %v678 = vunpack.c.l.b16 %v121
    %v679 = vunpack.c.h.b16 %v121
    %v680 = vunpack.c.l.b16 %v122
    %v681 = vunpack.c.h.b16 %v122
    %v682 = vunpack.c.l.b16 %v123
    %v683 = vunpack.c.h.b16 %v123
    %v684 = vunpack.c.l.b16 %v124
    %v685 = vunpack.c.h.b16 %v124
    %v686 = vunpack.c.l.b16 %v125
    %v687 = vunpack.c.h.b16 %v125
    %v688 = vunpack.c.l.b16 %v126
    %v689 = vunpack.c.h.b16 %v126
    %v690 = vunpack.c.l.b16 %v127
    %v691 = vunpack.c.h.b16 %v127
    %v692 = vunpack.c.l.b16 %v128
    %v693 = vunpack.c.h.b16 %v128
    %v694 = vunpack.c.l.b16 %v129
    %v695 = vunpack.c.h.b16 %v129
    %v696 = vunpack.c.l.b16 %v130
    %v697 = vunpack.c.h.b16 %v130
    %v698 = vunpack.c.l.b16 %v131
    %v699 = vunpack.c.h.b16 %v131
    %v700 = vunpack.c.l.b16 %v132
    %v701 = vunpack.c.h.b16 %v132
    %v702 = vunpack.c.l.b16 %v133
    %v703 = vunpack.c.h.b16 %v133
    %v704 = vunpack.c.l.b16 %v134
    %v705 = vunpack.c.h.b16 %v134
    %v706 = vunpack.c.l.b16 %v135
    %v707 = vunpack.c.h.b16 %v135
    %v708 = vunpack.c.l.b16 %v136
    %v709 = vunpack.c.h.b16 %v136
    %v710 = vunpack.c.l.b16 %v137
    %v711 = vunpack.c.h.b16 %v137
    %v712 = vunpack.c.l.b16 %v138
    %v713 = vunpack.c.h.b16 %v138
    %v714 = vunpack.c.l.b16 %v139
    %v715 = vunpack.c.h.b16 %v139
    %v716 = vunpack.c.l.b16 %v140
    %v717 = vunpack.c.h.b16 %v140
    %v718 = vunpack.c.l.b16 %v141
    %v719 = vunpack.c.h.b16 %v141
    %v720 = vunpack.c.l.b16 %v142
    %v721 = vunpack.c.h.b16 %v142
    %v722 = vunpack.c.l.b16 %v143
    %v723 = vunpack.c.h.b16 %v143
    %v724 = vunpack.c.l.b16 %v144
    %v725 = vunpack.c.h.b16 %v144
    %v726 = vunpack.c.l.b16 %v145
    %v727 = vunpack.c.h.b16 %v145
    %v728 = vunpack.c.l.b16 %v146
    %v729 = vunpack.c.h.b16 %v146
    %v730 = vunpack.c.l.b16 %v147
    %v731 = vunpack.c.h.b16 %v147
    %v732 = vunpack.c.l.b16 %v148
    %v733 = vunpack.c.h.b16 %v148
    %v734 = vunpack.c.l.b16 %v149
    %v735 = vunpack.c.h.b16 %v149
    %v736 = vunpack.c.l.b16 %v150
    %v737 = vunpack.c.h.b16 %v150
    %v738 = vunpack.c.l.b16 %v151
    %v739 = vunpack.c.h.b16 %v151
    %v740 = vunpack.c.l.b16 %v152
    %v741 = vunpack.c.h.b16 %v152
    %v742 = vunpack.c.l.b16 %v153
    %v743 = vunpack.c.h.b16 %v153
    %v744 = vunpack.c.l.b16 %v154
    %v745 = vunpack.c.h.b16 %v154
    %v746 = vunpack.c.l.b16 %v155
    %v747 = vunpack.c.h.b16 %v155
    %v748 = vunpack.c.l.b16 %v156
    %v749 = vunpack.c.h.b16 %v156
    %v750 = vunpack.c.l.b16 %v157
    %v751 = vunpack.c.h.b16 %v157
    %v752 = vunpack.c.l.b16 %v158
    %v753 = vunpack.c.h.b16 %v158
    %v754 = vunpack.c.l.b16 %v159
    %v755 = vunpack.c.h.b16 %v159
    %v756 = vunpack.c.l.b16 %v160
    %v757 = vunpack.c.h.b16 %v160
    %v758 = vunpack.c.l.b16 %v161
    %v759 = vunpack.c.h.b16 %v161
    %v760 = vunpack.c.l.b16 %v162
    %v761 = vunpack.c.h.b16 %v162
    %v762 = vunpack.c.l.b16 %v163
    %v763 = vunpack.c.h.b16 %v163
    %v764 = vunpack.c.l.b16 %v164
    %v765 = vunpack.c.h.b16 %v164
    %v766 = vunpack.c.l.b16 %v165
    %v767 = vunpack.c.h.b16 %v165
    %v768 = vunpack.c.l.b16 %v166
    %v769 = vunpack.c.h.b16 %v166
    %v770 = vunpack.c.l.b16 %v167
    %v771 = vunpack.c.h.b16 %v167
    %v772 = vunpack.c.l.b16 %v168
    %v773 = vunpack.c.h.b16 %v168
    %v774 = vunpack.c.l.b16 %v169
    %v775 = vunpack.c.h.b16 %v169
    %v776 = vunpack.c.l.b16 %v170
    %v777 = vunpack.c.h.b16 %v170
    %v778 = vunpack.c.l.b16 %v171
    %v779 = vunpack.c.h.b16 %v171
    %v780 = vunpack.c.l.b16 %v172
    %v781 = vunpack.c.h.b16 %v172
    %v782 = vunpack.c.l.b16 %v173
    %v783 = vunpack.c.h.b16 %v173
    %v784 = vunpack.c.l.b16 %v174
    %v785 = vunpack.c.h.b16 %v174
    %v786 = vunpack.c.l.b16 %v175
    %v787 = vunpack.c.h.b16 %v175
    %v788 = vunpack.c.l.b16 %v176
    %v789 = vunpack.c.h.b16 %v176
    %v790 = vunpack.c.l.b16 %v177
    %v791 = vunpack.c.h.b16 %v177
    %v792 = vunpack.c.l.b16 %v178
    %v793 = vunpack.c.h.b16 %v178
    %v794 = vunpack.c.l.b16 %v179
    %v795 = vunpack.c.h.b16 %v179
    %v796 = vunpack.c.l.b16 %v180
    %v797 = vunpack.c.h.b16 %v180
    %v798 = vunpack.c.l.b16 %v181
    %v799 = vunpack.c.h.b16 %v181
    %v800 = vunpack.c.l.b16 %v182
    %v801 = vunpack.c.h.b16 %v182
    %v802 = vunpack.c.l.b16 %v183
    %v803 = vunpack.c.h.b16 %v183
    %v804 = vunpack.c.l.b16 %v184
    %v805 = vunpack.c.h.b16 %v184
    %v806 = vunpack.c.l.b16 %v185
    %v807 = vunpack.c.h.b16 %v185
    %v808 = vunpack.c.l.b16 %v186
    %v809 = vunpack.c.h.b16 %v186
    %v810 = vunpack.c.l.b16 %v187
    %v811 = vunpack.c.h.b16 %v187
    %v812 = vunpack.c.l.b16 %v188
    %v813 = vunpack.c.h.b16 %v188
    %v814 = vunpack.c.l.b16 %v189
    %v815 = vunpack.c.h.b16 %v189
    %v816 = vunpack.c.l.b16 %v190
    %v817 = vunpack.c.h.b16 %v190
    %v818 = vunpack.c.l.b16 %v191
    %v819 = vunpack.c.h.b16 %v191
    %v820 = vunpack.c.l.b16 %v192
    %v821 = vunpack.c.h.b16 %v192
    %v822 = vunpack.c.l.b16 %v193
    %v823 = vunpack.c.h.b16 %v193
    %v824 = vunpack.c.l.b16 %v194
    %v825 = vunpack.c.h.b16 %v194
    %v826 = vunpack.c.l.b16 %v195
    %v827 = vunpack.c.h.b16 %v195
    %v828 = vunpack.c.l.b16 %v196
    %v829 = vunpack.c.h.b16 %v196
    %v830 = vunpack.c.l.b16 %v197
    %v831 = vunpack.c.h.b16 %v197
    %v832 = vunpack.c.l.b16 %v198
    %v833 = vunpack.c.h.b16 %v198
    %v834 = vunpack.c.l.b16 %v199
    %v835 = vunpack.c.h.b16 %v199
    %v836 = vunpack.c.l.b16 %v200
    %v837 = vunpack.c.h.b16 %v200
    %v838 = vunpack.c.l.b16 %v201
    %v839 = vunpack.c.h.b16 %v201
    %v840 = vunpack.c.l.b16 %v202
    %v841 = vunpack.c.h.b16 %v202
    %v842 = vunpack.c.l.b16 %v203
    %v843 = vunpack.c.h.b16 %v203
    %v844 = vunpack.c.l.b16 %v204
    %v845 = vunpack.c.h.b16 %v204
    %v846 = vunpack.c.l.b16 %v205
    %v847 = vunpack.c.h.b16 %v205
    %v848 = vunpack.c.l.b16 %v206
    %v849 = vunpack.c.h.b16 %v206
    %v850 = vunpack.c.l.b16 %v207
    %v851 = vunpack.c.h.b16 %v207
    %v852 = vunpack.c.l.b16 %v208
    %v853 = vunpack.c.h.b16 %v208
    %v854 = vunpack.c.l.b16 %v209
    %v855 = vunpack.c.h.b16 %v209
    %v856 = vunpack.c.l.b16 %v210
    %v857 = vunpack.c.h.b16 %v210
    %v858 = vunpack.c.l.b16 %v211
    %v859 = vunpack.c.h.b16 %v211
    %v860 = vunpack.c.l.b16 %v212
    %v861 = vunpack.c.h.b16 %v212
    %v862 = vunpack.c.l.b16 %v213
    %v863 = vunpack.c.h.b16 %v213
    %v864 = vunpack.c.l.b16 %v214
    %v865 = vunpack.c.h.b16 %v214
    %v866 = vunpack.c.l.b16 %v215
    %v867 = vunpack.c.h.b16 %v215
    %v868 = vunpack.c.l.b16 %v216
    %v869 = vunpack.c.h.b16 %v216
    %v870 = vunpack.c.l.b16 %v217
    %v871 = vunpack.c.h.b16 %v217
    %v872 = vunpack.c.l.b16 %v218
    %v873 = vunpack.c.h.b16 %v218
    %v874 = vunpack.c.l.b16 %v219
    %v875 = vunpack.c.h.b16 %v219
    %v876 = vunpack.c.l.b16 %v220
    %v877 = vunpack.c.h.b16 %v220
    %v878 = vunpack.c.l.b16 %v221
    %v879 = vunpack.c.h.b16 %v221
    %v880 = vunpack.c.l.b16 %v222
    %v881 = vunpack.c.h.b16 %v222
    %v882 = vunpack.c.l.b16 %v223
    %v883 = vunpack.c.h.b16 %v223
    %v884 = vunpack.c.l.b16 %v224
    %v885 = vunpack.c.h.b16 %v224
    %v886 = vunpack.c.l.b16 %v225
    %v887 = vunpack.c.h.b16 %v225
    %v888 = vunpack.c.l.b16 %v226
    %v889 = vunpack.c.h.b16 %v226
    %v890 = vunpack.c.l.b16 %v227
    %v891 = vunpack.c.h.b16 %v227
    %v892 = vunpack.c.l.b16 %v228
    %v893 = vunpack.c.h.b16 %v228
    %v894 = vunpack.c.l.b16 %v229
    %v895 = vunpack.c.h.b16 %v229
    %v896 = vunpack.c.l.b16 %v230
    %v897 = vunpack.c.h.b16 %v230
    %v898 = vunpack.c.l.b16 %v231
    %v899 = vunpack.c.h.b16 %v231
    %v900 = vunpack.c.l.b16 %v232
    %v901 = vunpack.c.h.b16 %v232
    %v902 = vunpack.c.l.b16 %v233
    %v903 = vunpack.c.h.b16 %v233
    %v904 = vunpack.c.l.b16 %v234
    %v905 = vunpack.c.h.b16 %v234
    %v906 = vunpack.c.l.b16 %v235
    %v907 = vunpack.c.h.b16 %v235
    %v908 = vunpack.c.l.b16 %v236
    %v909 = vunpack.c.h.b16 %v236
    %v910 = vunpack.c.l.b16 %v237
    %v911 = vunpack.c.h.b16 %v237
    %v912 = vunpack.c.l.b16 %v238
    %v913 = vunpack.c.h.b16 %v238
    %v914 = vunpack.c.l.b16 %v239
    %v915 = vunpack.c.h.b16 %v239
    %v916 = vunpack.c.l.b16 %v240
    %v917 = vunpack.c.h.b16 %v240
    %v918 = vunpack.c.l.b16 %v241
    %v919 = vunpack.c.h.b16 %v241
    %v920 = vunpack.c.l.b16 %v242
    %v921 = vunpack.c.h.b16 %v242
    %v922 = vunpack.c.l.b16 %v243
    %v923 = vunpack.c.h.b16 %v243
    %v924 = vunpack.c.l.b16 %v244
    %v925 = vunpack.c.h.b16 %v244
    %v926 = vunpack.c.l.b16 %v245
    %v927 = vunpack.c.h.b16 %v245
    %v928 = vunpack.c.l.b16 %v246
    %v929 = vunpack.c.h.b16 %v246
    %v930 = vunpack.c.l.b16 %v247
    %v931 = vunpack.c.h.b16 %v247
    %v932 = vunpack.c.l.b16 %v248
    %v933 = vunpack.c.h.b16 %v248
    %v934 = vunpack.c.l.b16 %v249
    %v935 = vunpack.c.h.b16 %v249
    %v936 = vunpack.c.l.b16 %v250
    %v937 = vunpack.c.h.b16 %v250
    %v938 = vunpack.c.l.b16 %v251
    %v939 = vunpack.c.h.b16 %v251
    %v940 = vunpack.c.l.b16 %v252
    %v941 = vunpack.c.h.b16 %v252
    %v942 = vunpack.c.l.b16 %v253
    %v943 = vunpack.c.h.b16 %v253
    %v944 = vunpack.c.l.b16 %v254
    %v945 = vunpack.c.h.b16 %v254
    %v946 = vunpack.c.l.b16 %v255
    %v947 = vunpack.c.h.b16 %v255
    %v948 = vunpack.c.l.b16 %v256
    %v949 = vunpack.c.h.b16 %v256
    %v950 = vunpack.c.l.b16 %v257
    %v951 = vunpack.c.h.b16 %v257
    %v952 = vunpack.c.l.b16 %v258
    %v953 = vunpack.c.h.b16 %v258
    %v954 = vunpack.c.l.b16 %v259
    %v955 = vunpack.c.h.b16 %v259
    %v956 = vunpack.c.l.b16 %v260
    %v957 = vunpack.c.h.b16 %v260
    %v958 = vunpack.c.l.b16 %v261
    %v959 = vunpack.c.h.b16 %v261
    %v960 = vunpack.c.l.b16 %v262
    %v961 = vunpack.c.h.b16 %v262
    %v962 = vunpack.c.l.b16 %v263
    %v963 = vunpack.c.h.b16 %v263
    %v964 = vunpack.c.l.b16 %v264
    %v965 = vunpack.c.h.b16 %v264
    %v966 = vunpack.c.l.b16 %v265
    %v967 = vunpack.c.h.b16 %v265
    %v968 = vunpack.c.l.b16 %v266
    %v969 = vunpack.c.h.b16 %v266
    %v970 = vunpack.c.l.b16 %v267
    %v971 = vunpack.c.h.b16 %v267
    %v972 = vunpack.c.l.b16 %v268
    %v973 = vunpack.c.h.b16 %v268
    %v974 = vunpack.c.l.b16 %v269
    %v975 = vunpack.c.h.b16 %v269
    %v976 = vunpack.c.l.b16 %v270
    %v977 = vunpack.c.h.b16 %v270
    %v978 = vunpack.c.l.b16 %v271
    %v979 = vunpack.c.h.b16 %v271
    %v980 = vunpack.c.l.b16 %v272
    %v981 = vunpack.c.h.b16 %v272
    %v982 = vunpack.c.l.b16 %v273
    %v983 = vunpack.c.h.b16 %v273
    %v984 = vunpack.c.l.b16 %v274
    %v985 = vunpack.c.h.b16 %v274
    %v986 = vunpack.c.l.b16 %v275
    %v987 = vunpack.c.h.b16 %v275
    %v988 = vunpack.c.l.b16 %v276
    %v989 = vunpack.c.h.b16 %v276
    %v990 = vunpack.c.l.b16 %v277
    %v991 = vunpack.c.h.b16 %v277
    %v992 = vunpack.c.l.b16 %v278
    %v993 = vunpack.c.h.b16 %v278
    %v994 = vunpack.c.l.b16 %v279
    %v995 = vunpack.c.h.b16 %v279
    %v996 = vunpack.c.l.b16 %v280
    %v997 = vunpack.c.h.b16 %v280
    %v998 = vunpack.c.l.b16 %v281
    %v999 = vunpack.c.h.b16 %v281
    %v1000 = vunpack.c.l.b16 %v282
    %v1001 = vunpack.c.h.b16 %v282
    %v1002 = vunpack.c.l.b16 %v283
    %v1003 = vunpack.c.h.b16 %v283
    %v1004 = vunpack.c.l.b16 %v284
    %v1005 = vunpack.c.h.b16 %v284
    %v1006 = vunpack.c.l.b16 %v285
    %v1007 = vunpack.c.h.b16 %v285
    %v1008 = vunpack.c.l.b16 %v286
    %v1009 = vunpack.c.h.b16 %v286
    %v1010 = vunpack.c.l.b16 %v287
    %v1011 = vunpack.c.h.b16 %v287
    %v1012 = vunpack.c.l.b16 %v288
    %v1013 = vunpack.c.h.b16 %v288
    %v1014 = vunpack.c.l.b16 %v289
    %v1015 = vunpack.c.h.b16 %v289
    %v1016 = vunpack.c.l.b16 %v290
    %v1017 = vunpack.c.h.b16 %v290
    %v1018 = vunpack.c.l.b16 %v291
    %v1019 = vunpack.c.h.b16 %v291
    %v1020 = vunpack.c.l.b16 %v292
    %v1021 = vunpack.c.h.b16 %v292
    %v1022 = vunpack.c.l.b16 %v293
    %v1023 = vunpack.c.h.b16 %v293
    %v1024 = vunpack.c.l.b16 %v294
    %v1025 = vunpack.c.h.b16 %v294
    %v1026 = vunpack.c.l.b16 %v295
    %v1027 = vunpack.c.h.b16 %v295
    %v1028 = vunpack.c.l.b16 %v296
    %v1029 = vunpack.c.h.b16 %v296
    %v1030 = vunpack.c.l.b16 %v297
    %v1031 = vunpack.c.h.b16 %v297
    %v1032 = vunpack.c.l.b16 %v298
    %v1033 = vunpack.c.h.b16 %v298
    %v1034 = vunpack.c.l.b16 %v299
    %v1035 = vunpack.c.h.b16 %v299
    %v1036 = vunpack.c.l.b16 %v300
    %v1037 = vunpack.c.h.b16 %v300
    %v1038 = vunpack.c.l.b16 %v301
    %v1039 = vunpack.c.h.b16 %v301
    %v1040 = vunpack.c.l.b16 %v302
    %v1041 = vunpack.c.h.b16 %v302
    %v1042 = vunpack.c.l.b16 %v303
    %v1043 = vunpack.c.h.b16 %v303
    %v1044 = vunpack.c.l.b16 %v304
    %v1045 = vunpack.c.h.b16 %v304
    %v1046 = vunpack.c.l.b16 %v305
    %v1047 = vunpack.c.h.b16 %v305
    %v1048 = vunpack.c.l.b16 %v306
    %v1049 = vunpack.c.h.b16 %v306
    %v1050 = vunpack.c.l.b16 %v307
    %v1051 = vunpack.c.h.b16 %v307
    %v1052 = vunpack.c.l.b16 %v308
    %v1053 = vunpack.c.h.b16 %v308
    %v1054 = vunpack.c.l.b16 %v309
    %v1055 = vunpack.c.h.b16 %v309
    %v1056 = vunpack.c.l.b16 %v310
    %v1057 = vunpack.c.h.b16 %v310
    %v1058 = vunpack.c.l.b16 %v311
    %v1059 = vunpack.c.h.b16 %v311
    %v1060 = vunpack.c.l.b16 %v312
    %v1061 = vunpack.c.h.b16 %v312
    %v1062 = vunpack.c.l.b16 %v313
    %v1063 = vunpack.c.h.b16 %v313
    %v1064 = vunpack.c.l.b16 %v314
    %v1065 = vunpack.c.h.b16 %v314
    %v1066 = vunpack.c.l.b16 %v315
    %v1067 = vunpack.c.h.b16 %v315
    %v1068 = vunpack.c.l.b16 %v316
    %v1069 = vunpack.c.h.b16 %v316
    %v1070 = vunpack.c.l.b16 %v317
    %v1071 = vunpack.c.h.b16 %v317
    %v1072 = vunpack.c.l.b16 %v318
    %v1073 = vunpack.c.h.b16 %v318
    %v1074 = vunpack.c.l.b16 %v319
    %v1075 = vunpack.c.h.b16 %v319
    %v1076 = vunpack.c.l.b16 %v320
    %v1077 = vunpack.c.h.b16 %v320
    %v1078 = vunpack.c.l.b16 %v321
    %v1079 = vunpack.c.h.b16 %v321
    %v1080 = vunpack.c.l.b16 %v322
    %v1081 = vunpack.c.h.b16 %v322
    %v1082 = vunpack.c.l.b16 %v323
    %v1083 = vunpack.c.h.b16 %v323
    %v1084 = vunpack.c.l.b16 %v324
    %v1085 = vunpack.c.h.b16 %v324
    %v1086 = vunpack.c.l.b16 %v325
    %v1087 = vunpack.c.h.b16 %v325
    %v1088 = vunpack.c.l.b16 %v326
    %v1089 = vunpack.c.h.b16 %v326
    %v1090 = vunpack.c.l.b16 %v327
    %v1091 = vunpack.c.h.b16 %v327
    %v1092 = vunpack.c.l.b16 %v328
    %v1093 = vunpack.c.h.b16 %v328
    %v1094 = vunpack.c.l.b16 %v329
    %v1095 = vunpack.c.h.b16 %v329
    %v1096 = vunpack.c.l.b16 %v330
    %v1097 = vunpack.c.h.b16 %v330
    %v1098 = vunpack.c.l.b16 %v331
    %v1099 = vunpack.c.h.b16 %v331
    %v1100 = vunpack.c.l.b16 %v332
    %v1101 = vunpack.c.h.b16 %v332
    %v1102 = vunpack.c.l.b16 %v333
    %v1103 = vunpack.c.h.b16 %v333
    %v1104 = vunpack.c.l.b16 %v334
    %v1105 = vunpack.c.h.b16 %v334
    %v1106 = vunpack.c.l.b16 %v335
    %v1107 = vunpack.c.h.b16 %v335
    %v1108 = vunpack.c.l.b16 %v336
    %v1109 = vunpack.c.h.b16 %v336
    %v1110 = vunpack.c.l.b16 %v337
    %v1111 = vunpack.c.h.b16 %v337
    %v1112 = vunpack.c.l.b16 %v338
    %v1113 = vunpack.c.h.b16 %v338
    %v1114 = vunpack.c.l.b16 %v339
    %v1115 = vunpack.c.h.b16 %v339
    %v1116 = vunpack.c.l.b16 %v340
    %v1117 = vunpack.c.h.b16 %v340
    %v1118 = vunpack.c.l.b16 %v341
    %v1119 = vunpack.c.h.b16 %v341
    %v1120 = vunpack.c.l.b16 %v342
    %v1121 = vunpack.c.h.b16 %v342
    %v1122 = vunpack.c.l.b16 %v343
    %v1123 = vunpack.c.h.b16 %v343
    %v1124 = vunpack.c.l.b16 %v344
    %v1125 = vunpack.c.h.b16 %v344
    %v1126 = vunpack.c.l.b16 %v345
    %v1127 = vunpack.c.h.b16 %v345
    %v1128 = vunpack.c.l.b16 %v346
    %v1129 = vunpack.c.h.b16 %v346
    %v1130 = vunpack.c.l.b16 %v347
    %v1131 = vunpack.c.h.b16 %v347
    %v1132 = vunpack.c.l.b16 %v348
    %v1133 = vunpack.c.h.b16 %v348
    %v1134 = vunpack.c.l.b16 %v349
    %v1135 = vunpack.c.h.b16 %v349
    %v1136 = vpack.c.b16 %v628, %v624
    %v1137 = vpack.c.b16 %v629, %v625
    %v1138 = vpack.c.b16 %v630, %v626
    %v1139 = vpack.c.b16 %v631, %v627
    %v1140 = vpack.c.b16 %v636, %v632
    %v1141 = vpack.c.b16 %v637, %v633
    %v1142 = vpack.c.b16 %v638, %v634
    %v1143 = vpack.c.b16 %v639, %v635
    %v1144 = vpack.c.b16 %v644, %v640
    %v1145 = vpack.c.b16 %v645, %v641
    %v1146 = vpack.c.b16 %v646, %v642
    %v1147 = vpack.c.b16 %v647, %v643
    %v1148 = vpack.c.b16 %v652, %v648
    %v1149 = vpack.c.b16 %v653, %v649
    %v1150 = vpack.c.b16 %v654, %v650
    %v1151 = vpack.c.b16 %v655, %v651
    %v1152 = vpack.c.b16 %v660, %v656
    %v1153 = vpack.c.b16 %v661, %v657
    %v1154 = vpack.c.b16 %v662, %v658
    %v1155 = vpack.c.b16 %v663, %v659
    %v1156 = vpack.c.b16 %v668, %v664
    %v1157 = vpack.c.b16 %v669, %v665
    %v1158 = vpack.c.b16 %v670, %v666
    %v1159 = vpack.c.b16 %v671, %v667
    %v1160 = vpack.c.b16 %v676, %v672
    %v1161 = vpack.c.b16 %v677, %v673
    %v1162 = vpack.c.b16 %v678, %v674
    %v1163 = vpack.c.b16 %v679, %v675
    %v1164 = vpack.c.b16 %v684, %v680
    %v1165 = vpack.c.b16 %v685, %v681
    %v1166 = vpack.c.b16 %v686, %v682
    %v1167 = vpack.c.b16 %v687, %v683
    %v1168 = vpack.c.b16 %v692, %v688
    %v1169 = vpack.c.b16 %v693, %v689
    %v1170 = vpack.c.b16 %v694, %v690
    %v1171 = vpack.c.b16 %v695, %v691
    %v1172 = vpack.c.b16 %v700, %v696
    %v1173 = vpack.c.b16 %v701, %v697
    %v1174 = vpack.c.b16 %v702, %v698
    %v1175 = vpack.c.b16 %v703, %v699
    %v1176 = vpack.c.b16 %v708, %v704
    %v1177 = vpack.c.b16 %v709, %v705
    %v1178 = vpack.c.b16 %v710, %v706
    %v1179 = vpack.c.b16 %v711, %v707
    %v1180 = vpack.c.b16 %v716, %v712
    %v1181 = vpack.c.b16 %v717, %v713
    %v1182 = vpack.c.b16 %v718, %v714
    %v1183 = vpack.c.b16 %v719, %v715
    %v1184 = vpack.c.b16 %v724, %v720
    %v1185 = vpack.c.b16 %v725, %v721
    %v1186 = vpack.c.b16 %v726, %v722
    %v1187 = vpack.c.b16 %v727, %v723
    %v1188 = vpack.c.b16 %v732, %v728
    %v1189 = vpack.c.b16 %v733, %v729
    %v1190 = vpack.c.b16 %v734, %v730
    %v1191 = vpack.c.b16 %v735, %v731
    %v1192 = vpack.c.b16 %v740, %v736
    %v1193 = vpack.c.b16 %v741, %v737
    %v1194 = vpack.c.b16 %v742, %v738
    %v1195 = vpack.c.b16 %v743, %v739
    %v1196 = vpack.c.b16 %v748, %v744
    %v1197 = vpack.c.b16 %v749, %v745
    %v1198 = vpack.c.b16 %v750, %v746
    %v1199 = vpack.c.b16 %v751, %v747
    %v1200 = vpack.c.b16 %v756, %v752
    %v1201 = vpack.c.b16 %v757, %v753
    %v1202 = vpack.c.b16 %v758, %v754
    %v1203 = vpack.c.b16 %v759, %v755
    %v1204 = vpack.c.b16 %v764, %v760
    %v1205 = vpack.c.b16 %v765, %v761
    %v1206 = vpack.c.b16 %v766, %v762
    %v1207 = vpack.c.b16 %v767, %v763
    %v1208 = vpack.c.b16 %v772, %v768
    %v1209 = vpack.c.b16 %v773, %v769
    %v1210 = vpack.c.b16 %v774, %v770
    %v1211 = vpack.c.b16 %v775, %v771
    %v1212 = vpack.c.b16 %v780, %v776
    %v1213 = vpack.c.b16 %v781, %v777
    %v1214 = vpack.c.b16 %v782, %v778
    %v1215 = vpack.c.b16 %v783, %v779
    %v1216 = vpack.c.b16 %v788, %v784
    %v1217 = vpack.c.b16 %v789, %v785
    %v1218 = vpack.c.b16 %v790, %v786
    %v1219 = vpack.c.b16 %v791, %v787
    %v1220 = vpack.c.b16 %v796, %v792
    %v1221 = vpack.c.b16 %v797, %v793
    %v1222 = vpack.c.b16 %v798, %v794
    %v1223 = vpack.c.b16 %v799, %v795
    %v1224 = vpack.c.b16 %v804, %v800
    %v1225 = vpack.c.b16 %v805, %v801
    %v1226 = vpack.c.b16 %v806, %v802
    %v1227 = vpack.c.b16 %v807, %v803
    %v1228 = vpack.c.b16 %v812, %v808
    %v1229 = vpack.c.b16 %v813, %v809
    %v1230 = vpack.c.b16 %v814, %v810
    %v1231 = vpack.c.b16 %v815, %v811
    %v1232 = vpack.c.b16 %v820, %v816
    %v1233 = vpack.c.b16 %v821, %v817
    %v1234 = vpack.c.b16 %v822, %v818
    %v1235 = vpack.c.b16 %v823, %v819
    %v1236 = vpack.c.b16 %v828, %v824
    %v1237 = vpack.c.b16 %v829, %v825
    %v1238 = vpack.c.b16 %v830, %v826
    %v1239 = vpack.c.b16 %v831, %v827
    %v1240 = vpack.c.b16 %v836, %v832
    %v1241 = vpack.c.b16 %v837, %v833
    %v1242 = vpack.c.b16 %v838, %v834
    %v1243 = vpack.c.b16 %v839, %v835
    %v1244 = vpack.c.b16 %v844, %v840
    %v1245 = vpack.c.b16 %v845, %v841
    %v1246 = vpack.c.b16 %v846, %v842
    %v1247 = vpack.c.b16 %v847, %v843
    %v1248 = vpack.c.b16 %v852, %v848
    %v1249 = vpack.c.b16 %v853, %v849
    %v1250 = vpack.c.b16 %v854, %v850
    %v1251 = vpack.c.b16 %v855, %v851
    %v1252 = vpack.c.b16 %v860, %v856
    %v1253 = vpack.c.b16 %v861, %v857
    %v1254 = vpack.c.b16 %v862, %v858
    %v1255 = vpack.c.b16 %v863, %v859
    %v1256 = vpack.c.b16 %v868, %v864
    %v1257 = vpack.c.b16 %v869, %v865
    %v1258 = vpack.c.b16 %v870, %v866
    %v1259 = vpack.c.b16 %v871, %v867
    %v1260 = vpack.c.b16 %v876, %v872
    %v1261 = vpack.c.b16 %v877, %v873
    %v1262 = vpack.c.b16 %v878, %v874
    %v1263 = vpack.c.b16 %v879, %v875
    %v1264 = vpack.c.b16 %v884, %v880
    %v1265 = vpack.c.b16 %v885, %v881
    %v1266 = vpack.c.b16 %v886, %v882
    %v1267 = vpack.c.b16 %v887, %v883
    %v1268 = vpack.c.b16 %v892, %v888
    %v1269 = vpack.c.b16 %v893, %v889
    %v1270 = vpack.c.b16 %v894, %v890
    %v1271 = vpack.c.b16 %v895, %v891
    %v1272 = vpack.c.b16 %v900, %v896
    %v1273 = vpack.c.b16 %v901, %v897
    %v1274 = vpack.c.b16 %v902, %v898
    %v1275 = vpack.c.b16 %v903, %v899
    %v1276 = vpack.c.b16 %v908, %v904
    %v1277 = vpack.c.b16 %v909, %v905
    %v1278 = vpack.c.b16 %v910, %v906
    %v1279 = vpack.c.b16 %v911, %v907
    %v1280 = vpack.c.b16 %v916, %v912
    %v1281 = vpack.c.b16 %v917, %v913
    %v1282 = vpack.c.b16 %v918, %v914
    %v1283 = vpack.c.b16 %v919, %v915
    %v1284 = vpack.c.b16 %v924, %v920
    %v1285 = vpack.c.b16 %v925, %v921
    %v1286 = vpack.c.b16 %v926, %v922
    %v1287 = vpack.c.b16 %v927, %v923
    %v1288 = vpack.c.b16 %v932, %v928
    %v1289 = vpack.c.b16 %v933, %v929
    %v1290 = vpack.c.b16 %v934, %v930
    %v1291 = vpack.c.b16 %v935, %v931
    %v1292 = vpack.c.b16 %v940, %v936
    %v1293 = vpack.c.b16 %v941, %v937
    %v1294 = vpack.c.b16 %v942, %v938
    %v1295 = vpack.c.b16 %v943, %v939
    %v1296 = vpack.c.b16 %v948, %v944
    %v1297 = vpack.c.b16 %v949, %v945
    %v1298 = vpack.c.b16 %v950, %v946
    %v1299 = vpack.c.b16 %v951, %v947
    %v1300 = vpack.c.b16 %v956, %v952
    %v1301 = vpack.c.b16 %v957, %v953
    %v1302 = vpack.c.b16 %v958, %v954
    %v1303 = vpack.c.b16 %v959, %v955
    %v1304 = vpack.c.b16 %v964, %v960
    %v1305 = vpack.c.b16 %v965, %v961
    %v1306 = vpack.c.b16 %v966, %v962
    %v1307 = vpack.c.b16 %v967, %v963
    %v1308 = vpack.c.b16 %v972, %v968
    %v1309 = vpack.c.b16 %v973, %v969
    %v1310 = vpack.c.b16 %v974, %v970
    %v1311 = vpack.c.b16 %v975, %v971
    %v1312 = vpack.c.b16 %v980, %v976
    %v1313 = vpack.c.b16 %v981, %v977
    %v1314 = vpack.c.b16 %v982, %v978
    %v1315 = vpack.c.b16 %v983, %v979
    %v1316 = vpack.c.b16 %v988, %v984
    %v1317 = vpack.c.b16 %v989, %v985
    %v1318 = vpack.c.b16 %v990, %v986
    %v1319 = vpack.c.b16 %v991, %v987
    %v1320 = vpack.c.b16 %v996, %v992
    %v1321 = vpack.c.b16 %v997, %v993
    %v1322 = vpack.c.b16 %v998, %v994
    %v1323 = vpack.c.b16 %v999, %v995
    %v1324 = vpack.c.b16 %v1004, %v1000
    %v1325 = vpack.c.b16 %v1005, %v1001
    %v1326 = vpack.c.b16 %v1006, %v1002
    %v1327 = vpack.c.b16 %v1007, %v1003
    %v1328 = vpack.c.b16 %v1012, %v1008
    %v1329 = vpack.c.b16 %v1013, %v1009
    %v1330 = vpack.c.b16 %v1014, %v1010
    %v1331 = vpack.c.b16 %v1015, %v1011
    %v1332 = vpack.c.b16 %v1020, %v1016
    %v1333 = vpack.c.b16 %v1021, %v1017
    %v1334 = vpack.c.b16 %v1022, %v1018
    %v1335 = vpack.c.b16 %v1023, %v1019
    %v1336 = vpack.c.b16 %v1028, %v1024
    %v1337 = vpack.c.b16 %v1029, %v1025
    %v1338 = vpack.c.b16 %v1030, %v1026
    %v1339 = vpack.c.b16 %v1031, %v1027
    %v1340 = vpack.c.b16 %v1036, %v1032
    %v1341 = vpack.c.b16 %v1037, %v1033
    %v1342 = vpack.c.b16 %v1038, %v1034
    %v1343 = vpack.c.b16 %v1039, %v1035
    %v1344 = vpack.c.b16 %v1044, %v1040
    %v1345 = vpack.c.b16 %v1045, %v1041
    %v1346 = vpack.c.b16 %v1046, %v1042
    %v1347 = vpack.c.b16 %v1047, %v1043
    %v1348 = vpack.c.b16 %v1052, %v1048
    %v1349 = vpack.c.b16 %v1053, %v1049
    %v1350 = vpack.c.b16 %v1054, %v1050
    %v1351 = vpack.c.b16 %v1055, %v1051
    %v1352 = vpack.c.b16 %v1060, %v1056
    %v1353 = vpack.c.b16 %v1061, %v1057
    %v1354 = vpack.c.b16 %v1062, %v1058
    %v1355 = vpack.c.b16 %v1063, %v1059
    %v1356 = vpack.c.b16 %v1068, %v1064
    %v1357 = vpack.c.b16 %v1069, %v1065
    %v1358 = vpack.c.b16 %v1070, %v1066
    %v1359 = vpack.c.b16 %v1071, %v1067
    %v1360 = vpack.c.b16 %v1076, %v1072
    %v1361 = vpack.c.b16 %v1077, %v1073
    %v1362 = vpack.c.b16 %v1078, %v1074
    %v1363 = vpack.c.b16 %v1079, %v1075
    %v1364 = vpack.c.b16 %v1084, %v1080
    %v1365 = vpack.c.b16 %v1085, %v1081
    %v1366 = vpack.c.b16 %v1086, %v1082
    %v1367 = vpack.c.b16 %v1087, %v1083
    %v1368 = vpack.c.b16 %v1092, %v1088
    %v1369 = vpack.c.b16 %v1093, %v1089
    %v1370 = vpack.c.b16 %v1094, %v1090
    %v1371 = vpack.c.b16 %v1095, %v1091
    %v1372 = vpack.c.b16 %v1100, %v1096
    %v1373 = vpack.c.b16 %v1101, %v1097
    %v1374 = vpack.c.b16 %v1102, %v1098
    %v1375 = vpack.c.b16 %v1103, %v1099
    %v1376 = vpack.c.b16 %v1108, %v1104
    %v1377 = vpack.c.b16 %v1109, %v1105
    %v1378 = vpack.c.b16 %v1110, %v1106
    %v1379 = vpack.c.b16 %v1111, %v1107
    %v1380 = vpack.c.b16 %v1116, %v1112
    %v1381 = vpack.c.b16 %v1117, %v1113
    %v1382 = vpack.c.b16 %v1118, %v1114
    %v1383 = vpack.c.b16 %v1119, %v1115
    %v1384 = vpack.c.b16 %v1124, %v1120
    %v1385 = vpack.c.b16 %v1125, %v1121
    %v1386 = vpack.c.b16 %v1126, %v1122
    %v1387 = vpack.c.b16 %v1127, %v1123
    %v1388 = vpack.c.b16 %v1132, %v1128
    %v1389 = vpack.c.b16 %v1133, %v1129
    %v1390 = vpack.c.b16 %v1134, %v1130
    %v1391 = vpack.c.b16 %v1135, %v1131
    %1648 = vmatpush.bf16.msra.mxu0 %v1164
    %1649 = vmatpush.bf16.msra.mxu0 %v1160
    %1650 = vmatpush.bf16.msra.mxu0 %v1156
    %1651 = vmatpush.bf16.msra.mxu0 %v1152
    %1652 = vmatpush.bf16.msra.mxu0 %v1148
    %1653 = vmatpush.bf16.msra.mxu0 %v1144
    %1654 = vmatpush.bf16.msra.mxu0 %v1140
    %1655 = vmatpush.bf16.msra.mxu0 %v1136
    %1656 = vmatmul.bf16.gmra.mxu0 %v352
    %v1657 = vpop.f32.mrf.mxu0
    %v1658 = vadd.f32 0.0, %v1657
    %v1659 = vpop.f32.mrf.mxu0
    %1660 = vdwg.mxu0
    %1661 = vmatpush.bf16.msra.mxu0 %v1196
    %1662 = vmatpush.bf16.msra.mxu0 %v1192
    %1663 = vmatpush.bf16.msra.mxu0 %v1188
    %1664 = vmatpush.bf16.msra.mxu0 %v1184
    %1665 = vmatpush.bf16.msra.mxu0 %v1180
    %1666 = vmatpush.bf16.msra.mxu0 %v1176
    %1667 = vmatpush.bf16.msra.mxu0 %v1172
    %1668 = vmatpush.bf16.msra.mxu0 %v1168
    %1669 = vmatmul.bf16.gmra.mxu0 %v353
    %v1670 = vpop.f32.mrf.mxu0
    %v1671 = vadd.f32 %v1658, %v1670
    %v1672 = vpop.f32.mrf.mxu0
    %1673 = vdwg.mxu0
    %1674 = vmatpush.bf16.msra.mxu0 %v1228
    %1675 = vmatpush.bf16.msra.mxu0 %v1224
    %1676 = vmatpush.bf16.msra.mxu0 %v1220
    %1677 = vmatpush.bf16.msra.mxu0 %v1216
    %1678 = vmatpush.bf16.msra.mxu0 %v1212
    %1679 = vmatpush.bf16.msra.mxu0 %v1208
    %1680 = vmatpush.bf16.msra.mxu0 %v1204
    %1681 = vmatpush.bf16.msra.mxu0 %v1200
    %1682 = vmatmul.bf16.gmra.mxu0 %v354
    %v1683 = vpop.f32.mrf.mxu0
    %v1684 = vadd.f32 %v1671, %v1683
    %v1685 = vpop.f32.mrf.mxu0
    %1686 = vdwg.mxu0
    %1687 = vmatpush.bf16.msra.mxu0 %v1260
    %1688 = vmatpush.bf16.msra.mxu0 %v1256
    %1689 = vmatpush.bf16.msra.mxu0 %v1252
    %1690 = vmatpush.bf16.msra.mxu0 %v1248
    %1691 = vmatpush.bf16.msra.mxu0 %v1244
    %1692 = vmatpush.bf16.msra.mxu0 %v1240
    %1693 = vmatpush.bf16.msra.mxu0 %v1236
    %1694 = vmatpush.bf16.msra.mxu0 %v1232
    %1695 = vmatmul.bf16.gmra.mxu0 %v355
    %v1696 = vpop.f32.mrf.mxu0
    %v1697 = vadd.f32 %v1684, %v1696
    %v1698 = vpop.f32.mrf.mxu0
    %1699 = vdwg.mxu0
    %1700 = vmatpush.bf16.msra.mxu0 %v1292
    %1701 = vmatpush.bf16.msra.mxu0 %v1288
    %1702 = vmatpush.bf16.msra.mxu0 %v1284
    %1703 = vmatpush.bf16.msra.mxu0 %v1280
    %1704 = vmatpush.bf16.msra.mxu0 %v1276
    %1705 = vmatpush.bf16.msra.mxu0 %v1272
    %1706 = vmatpush.bf16.msra.mxu0 %v1268
    %1707 = vmatpush.bf16.msra.mxu0 %v1264
    %1708 = vmatmul.bf16.gmra.mxu0 %v356
    %v1709 = vpop.f32.mrf.mxu0
    %v1710 = vadd.f32 %v1697, %v1709
    %v1711 = vpop.f32.mrf.mxu0
    %1712 = vdwg.mxu0
    %1713 = vmatpush.bf16.msra.mxu0 %v1324
    %1714 = vmatpush.bf16.msra.mxu0 %v1320
    %1715 = vmatpush.bf16.msra.mxu0 %v1316
    %1716 = vmatpush.bf16.msra.mxu0 %v1312
    %1717 = vmatpush.bf16.msra.mxu0 %v1308
    %1718 = vmatpush.bf16.msra.mxu0 %v1304
    %1719 = vmatpush.bf16.msra.mxu0 %v1300
    %1720 = vmatpush.bf16.msra.mxu0 %v1296
    %1721 = vmatmul.bf16.gmra.mxu0 %v357
    %v1722 = vpop.f32.mrf.mxu0
    %v1723 = vadd.f32 %v1710, %v1722
    %v1724 = vpop.f32.mrf.mxu0
    %1725 = vdwg.mxu0
    %1726 = vmatpush.bf16.msra.mxu0 %v1356
    %1727 = vmatpush.bf16.msra.mxu0 %v1352
    %1728 = vmatpush.bf16.msra.mxu0 %v1348
    %1729 = vmatpush.bf16.msra.mxu0 %v1344
    %1730 = vmatpush.bf16.msra.mxu0 %v1340
    %1731 = vmatpush.bf16.msra.mxu0 %v1336
    %1732 = vmatpush.bf16.msra.mxu0 %v1332
    %1733 = vmatpush.bf16.msra.mxu0 %v1328
    %1734 = vmatmul.bf16.gmra.mxu0 %v358
    %v1735 = vpop.f32.mrf.mxu0
    %v1736 = vadd.f32 %v1723, %v1735
    %v1737 = vpop.f32.mrf.mxu0
    %1738 = vdwg.mxu0
    %1739 = vmatpush.bf16.msra.mxu0 %v1388
    %1740 = vmatpush.bf16.msra.mxu0 %v1384
    %1741 = vmatpush.bf16.msra.mxu0 %v1380
    %1742 = vmatpush.bf16.msra.mxu0 %v1376
    %1743 = vmatpush.bf16.msra.mxu0 %v1372
    %1744 = vmatpush.bf16.msra.mxu0 %v1368
    %1745 = vmatpush.bf16.msra.mxu0 %v1364
    %1746 = vmatpush.bf16.msra.mxu0 %v1360
    %1747 = vmatmul.bf16.gmra.mxu0 %v359
    %v1748 = vpop.f32.mrf.mxu0
    %v1749 = vadd.f32 %v1736, %v1748
    %v1750 = vpop.f32.mrf.mxu0
    %1751 = vdwg.mxu0
    %1752 = vmatpush.bf16.msra.mxu0 %v1165
    %1753 = vmatpush.bf16.msra.mxu0 %v1161
    %1754 = vmatpush.bf16.msra.mxu0 %v1157
    %1755 = vmatpush.bf16.msra.mxu0 %v1153
    %1756 = vmatpush.bf16.msra.mxu0 %v1149
    %1757 = vmatpush.bf16.msra.mxu0 %v1145
    %1758 = vmatpush.bf16.msra.mxu0 %v1141
    %1759 = vmatpush.bf16.msra.mxu0 %v1137
    %1760 = vmatmul.bf16.gmra.mxu0 %v352
    %v1761 = vpop.f32.mrf.mxu0
    %v1762 = vadd.f32 0.0, %v1761
    %v1763 = vpop.f32.mrf.mxu0
    %1764 = vdwg.mxu0
    %1765 = vmatpush.bf16.msra.mxu0 %v1197
    %1766 = vmatpush.bf16.msra.mxu0 %v1193
    %1767 = vmatpush.bf16.msra.mxu0 %v1189
    %1768 = vmatpush.bf16.msra.mxu0 %v1185
    %1769 = vmatpush.bf16.msra.mxu0 %v1181
    %1770 = vmatpush.bf16.msra.mxu0 %v1177
    %1771 = vmatpush.bf16.msra.mxu0 %v1173
    %1772 = vmatpush.bf16.msra.mxu0 %v1169
    %1773 = vmatmul.bf16.gmra.mxu0 %v353
    %v1774 = vpop.f32.mrf.mxu0
    %v1775 = vadd.f32 %v1762, %v1774
    %v1776 = vpop.f32.mrf.mxu0
    %1777 = vdwg.mxu0
    %1778 = vmatpush.bf16.msra.mxu0 %v1229
    %1779 = vmatpush.bf16.msra.mxu0 %v1225
    %1780 = vmatpush.bf16.msra.mxu0 %v1221
    %1781 = vmatpush.bf16.msra.mxu0 %v1217
    %1782 = vmatpush.bf16.msra.mxu0 %v1213
    %1783 = vmatpush.bf16.msra.mxu0 %v1209
    %1784 = vmatpush.bf16.msra.mxu0 %v1205
    %1785 = vmatpush.bf16.msra.mxu0 %v1201
    %1786 = vmatmul.bf16.gmra.mxu0 %v354
    %v1787 = vpop.f32.mrf.mxu0
    %v1788 = vadd.f32 %v1775, %v1787
    %v1789 = vpop.f32.mrf.mxu0
    %1790 = vdwg.mxu0
    %1791 = vmatpush.bf16.msra.mxu0 %v1261
    %1792 = vmatpush.bf16.msra.mxu0 %v1257
    %1793 = vmatpush.bf16.msra.mxu0 %v1253
    %1794 = vmatpush.bf16.msra.mxu0 %v1249
    %1795 = vmatpush.bf16.msra.mxu0 %v1245
    %1796 = vmatpush.bf16.msra.mxu0 %v1241
    %1797 = vmatpush.bf16.msra.mxu0 %v1237
    %1798 = vmatpush.bf16.msra.mxu0 %v1233
    %1799 = vmatmul.bf16.gmra.mxu0 %v355
    %v1800 = vpop.f32.mrf.mxu0
    %v1801 = vadd.f32 %v1788, %v1800
    %v1802 = vpop.f32.mrf.mxu0
    %1803 = vdwg.mxu0
    %1804 = vmatpush.bf16.msra.mxu0 %v1293
    %1805 = vmatpush.bf16.msra.mxu0 %v1289
    %1806 = vmatpush.bf16.msra.mxu0 %v1285
    %1807 = vmatpush.bf16.msra.mxu0 %v1281
    %1808 = vmatpush.bf16.msra.mxu0 %v1277
    %1809 = vmatpush.bf16.msra.mxu0 %v1273
    %1810 = vmatpush.bf16.msra.mxu0 %v1269
    %1811 = vmatpush.bf16.msra.mxu0 %v1265
    %1812 = vmatmul.bf16.gmra.mxu0 %v356
    %v1813 = vpop.f32.mrf.mxu0
    %v1814 = vadd.f32 %v1801, %v1813
    %v1815 = vpop.f32.mrf.mxu0
    %1816 = vdwg.mxu0
    %1817 = vmatpush.bf16.msra.mxu0 %v1325
    %1818 = vmatpush.bf16.msra.mxu0 %v1321
    %1819 = vmatpush.bf16.msra.mxu0 %v1317
    %1820 = vmatpush.bf16.msra.mxu0 %v1313
    %1821 = vmatpush.bf16.msra.mxu0 %v1309
    %1822 = vmatpush.bf16.msra.mxu0 %v1305
    %1823 = vmatpush.bf16.msra.mxu0 %v1301
    %1824 = vmatpush.bf16.msra.mxu0 %v1297
    %1825 = vmatmul.bf16.gmra.mxu0 %v357
    %v1826 = vpop.f32.mrf.mxu0
    %v1827 = vadd.f32 %v1814, %v1826
    %v1828 = vpop.f32.mrf.mxu0
    %1829 = vdwg.mxu0
    %1830 = vmatpush.bf16.msra.mxu0 %v1357
    %1831 = vmatpush.bf16.msra.mxu0 %v1353
    %1832 = vmatpush.bf16.msra.mxu0 %v1349
    %1833 = vmatpush.bf16.msra.mxu0 %v1345
    %1834 = vmatpush.bf16.msra.mxu0 %v1341
    %1835 = vmatpush.bf16.msra.mxu0 %v1337
    %1836 = vmatpush.bf16.msra.mxu0 %v1333
    %1837 = vmatpush.bf16.msra.mxu0 %v1329
    %1838 = vmatmul.bf16.gmra.mxu0 %v358
    %v1839 = vpop.f32.mrf.mxu0
    %v1840 = vadd.f32 %v1827, %v1839
    %v1841 = vpop.f32.mrf.mxu0
    %1842 = vdwg.mxu0
    %1843 = vmatpush.bf16.msra.mxu0 %v1389
    %1844 = vmatpush.bf16.msra.mxu0 %v1385
    %1845 = vmatpush.bf16.msra.mxu0 %v1381
    %1846 = vmatpush.bf16.msra.mxu0 %v1377
    %1847 = vmatpush.bf16.msra.mxu0 %v1373
    %1848 = vmatpush.bf16.msra.mxu0 %v1369
    %1849 = vmatpush.bf16.msra.mxu0 %v1365
    %1850 = vmatpush.bf16.msra.mxu0 %v1361
    %1851 = vmatmul.bf16.gmra.mxu0 %v359
    %v1852 = vpop.f32.mrf.mxu0
    %v1853 = vadd.f32 %v1840, %v1852
    %v1854 = vpop.f32.mrf.mxu0
    %1855 = vdwg.mxu0
    %1856 = vmatpush.bf16.msra.mxu0 %v1166
    %1857 = vmatpush.bf16.msra.mxu0 %v1162
    %1858 = vmatpush.bf16.msra.mxu0 %v1158
    %1859 = vmatpush.bf16.msra.mxu0 %v1154
    %1860 = vmatpush.bf16.msra.mxu0 %v1150
    %1861 = vmatpush.bf16.msra.mxu0 %v1146
    %1862 = vmatpush.bf16.msra.mxu0 %v1142
    %1863 = vmatpush.bf16.msra.mxu0 %v1138
    %1864 = vmatmul.bf16.gmra.mxu0 %v352
    %v1865 = vpop.f32.mrf.mxu0
    %v1866 = vadd.f32 0.0, %v1865
    %v1867 = vpop.f32.mrf.mxu0
    %1868 = vdwg.mxu0
    %1869 = vmatpush.bf16.msra.mxu0 %v1198
    %1870 = vmatpush.bf16.msra.mxu0 %v1194
    %1871 = vmatpush.bf16.msra.mxu0 %v1190
    %1872 = vmatpush.bf16.msra.mxu0 %v1186
    %1873 = vmatpush.bf16.msra.mxu0 %v1182
    %1874 = vmatpush.bf16.msra.mxu0 %v1178
    %1875 = vmatpush.bf16.msra.mxu0 %v1174
    %1876 = vmatpush.bf16.msra.mxu0 %v1170
    %1877 = vmatmul.bf16.gmra.mxu0 %v353
    %v1878 = vpop.f32.mrf.mxu0
    %v1879 = vadd.f32 %v1866, %v1878
    %v1880 = vpop.f32.mrf.mxu0
    %1881 = vdwg.mxu0
    %1882 = vmatpush.bf16.msra.mxu0 %v1230
    %1883 = vmatpush.bf16.msra.mxu0 %v1226
    %1884 = vmatpush.bf16.msra.mxu0 %v1222
    %1885 = vmatpush.bf16.msra.mxu0 %v1218
    %1886 = vmatpush.bf16.msra.mxu0 %v1214
    %1887 = vmatpush.bf16.msra.mxu0 %v1210
    %1888 = vmatpush.bf16.msra.mxu0 %v1206
    %1889 = vmatpush.bf16.msra.mxu0 %v1202
    %1890 = vmatmul.bf16.gmra.mxu0 %v354
    %v1891 = vpop.f32.mrf.mxu0
    %v1892 = vadd.f32 %v1879, %v1891
    %v1893 = vpop.f32.mrf.mxu0
    %1894 = vdwg.mxu0
    %1895 = vmatpush.bf16.msra.mxu0 %v1262
    %1896 = vmatpush.bf16.msra.mxu0 %v1258
    %1897 = vmatpush.bf16.msra.mxu0 %v1254
    %1898 = vmatpush.bf16.msra.mxu0 %v1250
    %1899 = vmatpush.bf16.msra.mxu0 %v1246
    %1900 = vmatpush.bf16.msra.mxu0 %v1242
    %1901 = vmatpush.bf16.msra.mxu0 %v1238
    %1902 = vmatpush.bf16.msra.mxu0 %v1234
    %1903 = vmatmul.bf16.gmra.mxu0 %v355
    %v1904 = vpop.f32.mrf.mxu0
    %v1905 = vadd.f32 %v1892, %v1904
    %v1906 = vpop.f32.mrf.mxu0
    %1907 = vdwg.mxu0
    %1908 = vmatpush.bf16.msra.mxu0 %v1294
    %1909 = vmatpush.bf16.msra.mxu0 %v1290
    %1910 = vmatpush.bf16.msra.mxu0 %v1286
    %1911 = vmatpush.bf16.msra.mxu0 %v1282
    %1912 = vmatpush.bf16.msra.mxu0 %v1278
    %1913 = vmatpush.bf16.msra.mxu0 %v1274
    %1914 = vmatpush.bf16.msra.mxu0 %v1270
    %1915 = vmatpush.bf16.msra.mxu0 %v1266
    %1916 = vmatmul.bf16.gmra.mxu0 %v356
    %v1917 = vpop.f32.mrf.mxu0
    %v1918 = vadd.f32 %v1905, %v1917
    %v1919 = vpop.f32.mrf.mxu0
    %1920 = vdwg.mxu0
    %1921 = vmatpush.bf16.msra.mxu0 %v1326
    %1922 = vmatpush.bf16.msra.mxu0 %v1322
    %1923 = vmatpush.bf16.msra.mxu0 %v1318
    %1924 = vmatpush.bf16.msra.mxu0 %v1314
    %1925 = vmatpush.bf16.msra.mxu0 %v1310
    %1926 = vmatpush.bf16.msra.mxu0 %v1306
    %1927 = vmatpush.bf16.msra.mxu0 %v1302
    %1928 = vmatpush.bf16.msra.mxu0 %v1298
    %1929 = vmatmul.bf16.gmra.mxu0 %v357
    %v1930 = vpop.f32.mrf.mxu0
    %v1931 = vadd.f32 %v1918, %v1930
    %v1932 = vpop.f32.mrf.mxu0
    %1933 = vdwg.mxu0
    %1934 = vmatpush.bf16.msra.mxu0 %v1358
    %1935 = vmatpush.bf16.msra.mxu0 %v1354
    %1936 = vmatpush.bf16.msra.mxu0 %v1350
    %1937 = vmatpush.bf16.msra.mxu0 %v1346
    %1938 = vmatpush.bf16.msra.mxu0 %v1342
    %1939 = vmatpush.bf16.msra.mxu0 %v1338
    %1940 = vmatpush.bf16.msra.mxu0 %v1334
    %1941 = vmatpush.bf16.msra.mxu0 %v1330
    %1942 = vmatmul.bf16.gmra.mxu0 %v358
    %v1943 = vpop.f32.mrf.mxu0
    %v1944 = vadd.f32 %v1931, %v1943
    %v1945 = vpop.f32.mrf.mxu0
    %1946 = vdwg.mxu0
    %1947 = vmatpush.bf16.msra.mxu0 %v1390
    %1948 = vmatpush.bf16.msra.mxu0 %v1386
    %1949 = vmatpush.bf16.msra.mxu0 %v1382
    %1950 = vmatpush.bf16.msra.mxu0 %v1378
    %1951 = vmatpush.bf16.msra.mxu0 %v1374
    %1952 = vmatpush.bf16.msra.mxu0 %v1370
    %1953 = vmatpush.bf16.msra.mxu0 %v1366
    %1954 = vmatpush.bf16.msra.mxu0 %v1362
    %1955 = vmatmul.bf16.gmra.mxu0 %v359
    %v1956 = vpop.f32.mrf.mxu0
    %v1957 = vadd.f32 %v1944, %v1956
    %v1958 = vpop.f32.mrf.mxu0
    %1959 = vdwg.mxu0
    %1960 = vmatpush.bf16.msra.mxu0 %v1167
    %1961 = vmatpush.bf16.msra.mxu0 %v1163
    %1962 = vmatpush.bf16.msra.mxu0 %v1159
    %1963 = vmatpush.bf16.msra.mxu0 %v1155
    %1964 = vmatpush.bf16.msra.mxu0 %v1151
    %1965 = vmatpush.bf16.msra.mxu0 %v1147
    %1966 = vmatpush.bf16.msra.mxu0 %v1143
    %1967 = vmatpush.bf16.msra.mxu0 %v1139
    %1968 = vmatmul.bf16.gmra.mxu0 %v352
    %v1969 = vpop.f32.mrf.mxu0
    %v1970 = vadd.f32 0.0, %v1969
    %v1971 = vpop.f32.mrf.mxu0
    %1972 = vdwg.mxu0
    %1973 = vmatpush.bf16.msra.mxu0 %v1199
    %1974 = vmatpush.bf16.msra.mxu0 %v1195
    %1975 = vmatpush.bf16.msra.mxu0 %v1191
    %1976 = vmatpush.bf16.msra.mxu0 %v1187
    %1977 = vmatpush.bf16.msra.mxu0 %v1183
    %1978 = vmatpush.bf16.msra.mxu0 %v1179
    %1979 = vmatpush.bf16.msra.mxu0 %v1175
    %1980 = vmatpush.bf16.msra.mxu0 %v1171
    %1981 = vmatmul.bf16.gmra.mxu0 %v353
    %v1982 = vpop.f32.mrf.mxu0
    %v1983 = vadd.f32 %v1970, %v1982
    %v1984 = vpop.f32.mrf.mxu0
    %1985 = vdwg.mxu0
    %1986 = vmatpush.bf16.msra.mxu0 %v1231
    %1987 = vmatpush.bf16.msra.mxu0 %v1227
    %1988 = vmatpush.bf16.msra.mxu0 %v1223
    %1989 = vmatpush.bf16.msra.mxu0 %v1219
    %1990 = vmatpush.bf16.msra.mxu0 %v1215
    %1991 = vmatpush.bf16.msra.mxu0 %v1211
    %1992 = vmatpush.bf16.msra.mxu0 %v1207
    %1993 = vmatpush.bf16.msra.mxu0 %v1203
    %1994 = vmatmul.bf16.gmra.mxu0 %v354
    %v1995 = vpop.f32.mrf.mxu0
    %v1996 = vadd.f32 %v1983, %v1995
    %v1997 = vpop.f32.mrf.mxu0
    %1998 = vdwg.mxu0
    %1999 = vmatpush.bf16.msra.mxu0 %v1263
    %2000 = vmatpush.bf16.msra.mxu0 %v1259
    %2001 = vmatpush.bf16.msra.mxu0 %v1255
    %2002 = vmatpush.bf16.msra.mxu0 %v1251
    %2003 = vmatpush.bf16.msra.mxu0 %v1247
    %2004 = vmatpush.bf16.msra.mxu0 %v1243
    %2005 = vmatpush.bf16.msra.mxu0 %v1239
    %2006 = vmatpush.bf16.msra.mxu0 %v1235
    %2007 = vmatmul.bf16.gmra.mxu0 %v355
    %v2008 = vpop.f32.mrf.mxu0
    %v2009 = vadd.f32 %v1996, %v2008
    %v2010 = vpop.f32.mrf.mxu0
    %2011 = vdwg.mxu0
    %2012 = vmatpush.bf16.msra.mxu0 %v1295
    %2013 = vmatpush.bf16.msra.mxu0 %v1291
    %2014 = vmatpush.bf16.msra.mxu0 %v1287
    %2015 = vmatpush.bf16.msra.mxu0 %v1283
    %2016 = vmatpush.bf16.msra.mxu0 %v1279
    %2017 = vmatpush.bf16.msra.mxu0 %v1275
    %2018 = vmatpush.bf16.msra.mxu0 %v1271
    %2019 = vmatpush.bf16.msra.mxu0 %v1267
    %2020 = vmatmul.bf16.gmra.mxu0 %v356
    %v2021 = vpop.f32.mrf.mxu0
    %v2022 = vadd.f32 %v2009, %v2021
    %v2023 = vpop.f32.mrf.mxu0
    %2024 = vdwg.mxu0
    %2025 = vmatpush.bf16.msra.mxu0 %v1327
    %2026 = vmatpush.bf16.msra.mxu0 %v1323
    %2027 = vmatpush.bf16.msra.mxu0 %v1319
    %2028 = vmatpush.bf16.msra.mxu0 %v1315
    %2029 = vmatpush.bf16.msra.mxu0 %v1311
    %2030 = vmatpush.bf16.msra.mxu0 %v1307
    %2031 = vmatpush.bf16.msra.mxu0 %v1303
    %2032 = vmatpush.bf16.msra.mxu0 %v1299
    %2033 = vmatmul.bf16.gmra.mxu0 %v357
    %v2034 = vpop.f32.mrf.mxu0
    %v2035 = vadd.f32 %v2022, %v2034
    %v2036 = vpop.f32.mrf.mxu0
    %2037 = vdwg.mxu0
    %2038 = vmatpush.bf16.msra.mxu0 %v1359
    %2039 = vmatpush.bf16.msra.mxu0 %v1355
    %2040 = vmatpush.bf16.msra.mxu0 %v1351
    %2041 = vmatpush.bf16.msra.mxu0 %v1347
    %2042 = vmatpush.bf16.msra.mxu0 %v1343
    %2043 = vmatpush.bf16.msra.mxu0 %v1339
    %2044 = vmatpush.bf16.msra.mxu0 %v1335
    %2045 = vmatpush.bf16.msra.mxu0 %v1331
    %2046 = vmatmul.bf16.gmra.mxu0 %v358
    %v2047 = vpop.f32.mrf.mxu0
    %v2048 = vadd.f32 %v2035, %v2047
    %v2049 = vpop.f32.mrf.mxu0
    %2050 = vdwg.mxu0
    %2051 = vmatpush.bf16.msra.mxu0 %v1391
    %2052 = vmatpush.bf16.msra.mxu0 %v1387
    %2053 = vmatpush.bf16.msra.mxu0 %v1383
    %2054 = vmatpush.bf16.msra.mxu0 %v1379
    %2055 = vmatpush.bf16.msra.mxu0 %v1375
    %2056 = vmatpush.bf16.msra.mxu0 %v1371
    %2057 = vmatpush.bf16.msra.mxu0 %v1367
    %2058 = vmatpush.bf16.msra.mxu0 %v1363
    %2059 = vmatmul.bf16.gmra.mxu0 %v359
    %v2060 = vpop.f32.mrf.mxu0
    %v2061 = vadd.f32 %v2048, %v2060
    %v2062 = vpop.f32.mrf.mxu0
    %2063 = vdwg.mxu0
    %v2068 = vrot.slane %v1853, 6
    %v2069 = vrot.slane %v1957, 4
    %v2070 = vrot.slane %v2061, 2
    %vm2071 = vcmask 1041408
    %v2072 = vsel %vm2071, %v1749, %v2068
    %vm2073 = vcmask 1045508
    %v2074 = vsel %vm2073, %v2069, %v2070
    %vm2075 = vcmask 1043456
    %v2076 = vsel %vm2075, %v2072, %v2074
    %v2078 = vadd.f32 %v92, %v2076
    %2079 = vst [vmem:[#allocation2] sm:$0xff] %v2078
    // Predicated region
    $region50: #{tpu_custom_call.1} parent=1 // pred_check
      %p2080 = pneg %p87
    $region51: #{tpu_custom_call.1} parent=1 // pred_check_branch
      %2082 = sbr.rel (%p2080) target = $region53
    $region52: #{tpu_custom_call.1} parent=1 // pred_region
      %v2083 = vld [vmem:[#allocation2] sm:$0xff]
      %v2084 = vld [vmem:[#allocation8] sm:$0xf]
      %v2086 = vperm.slane %v2084, 0
      %v2087 = vperm.slane %v2084, 1
      %v2088 = vperm.slane %v2084, 2
      %v2089 = vperm.slane %v2084, 3
      %v2090 = vrot.slane %v2087, 6
      %v2091 = vrot.slane %v2088, 4
      %v2092 = vrot.slane %v2089, 2
      %v2093 = vsel %vm2071, %v2086, %v2090
      %v2094 = vsel %vm2073, %v2091, %v2092
      %v2095 = vsel %vm2075, %v2093, %v2094
      %v2097 = vadd.f32 %v2083, %v2095
      %vm2098 = vcmp.gt.f32.partialorder %v2097, 0.0
      %v2099 = vmul.f32 %v2097, 0.2
      %v2100 = vsel %vm2098, %v2097, %v2099
      %2102 = vst [vmem:[#allocation1] ss:$4 sm:$0xff] %v2100
      %v2103 = vld.sshfl [vmem:[#allocation1] sm:$0xff pattern:$0x73625140]
      %v2104 = vld.sshfl [vmem:[#allocation1 + $0x8] sm:$0xff pattern:$0x73625140]
      %v2105 = vld.sshfl [vmem:[#allocation1 + $0x10] sm:$0xff pattern:$0x73625140]
      %v2106 = vld.sshfl [vmem:[#allocation1 + $0x18] sm:$0xff pattern:$0x73625140]
      %v2111 = vpack.c.bf16 %v2103, %v2103
      %v2112 = vpack.c.bf16 %v2104, %v2104
      %v2113 = vpack.c.bf16 %v2105, %v2105
      %v2114 = vpack.c.bf16 %v2106, %v2106
      %v2115 = vld [vmem:[#allocation9] sm:$0xff]
      %v2116 = vld [vmem:[#allocation9 + $0x8] sm:$0xff]
      %v2117 = vld [vmem:[#allocation9 + $0x10] sm:$0xff]
      %v2118 = vld [vmem:[#allocation9 + $0x18] sm:$0xff]
      %v2119 = vld [vmem:[#allocation9 + $0x20] sm:$0xff]
      %v2120 = vld [vmem:[#allocation9 + $0x28] sm:$0xff]
      %v2121 = vld [vmem:[#allocation9 + $0x30] sm:$0xff]
      %v2122 = vld [vmem:[#allocation9 + $0x38] sm:$0xff]
      %v2123 = vld [vmem:[#allocation9 + $0x40] sm:$0xff]
      %v2124 = vld [vmem:[#allocation9 + $0x48] sm:$0xff]
      %v2125 = vld [vmem:[#allocation9 + $0x50] sm:$0xff]
      %v2126 = vld [vmem:[#allocation9 + $0x58] sm:$0xff]
      %v2127 = vld [vmem:[#allocation9 + $0x60] sm:$0xff]
      %v2128 = vld [vmem:[#allocation9 + $0x68] sm:$0xff]
      %v2129 = vld [vmem:[#allocation9 + $0x70] sm:$0xff]
      %v2130 = vld [vmem:[#allocation9 + $0x78] sm:$0xff]
      %v2131 = vld [vmem:[#allocation9 + $0x80] sm:$0xff]
      %v2132 = vld [vmem:[#allocation9 + $0x88] sm:$0xff]
      %v2133 = vld [vmem:[#allocation9 + $0x90] sm:$0xff]
      %v2134 = vld [vmem:[#allocation9 + $0x98] sm:$0xff]
      %v2135 = vld [vmem:[#allocation9 + $0xa0] sm:$0xff]
      %v2136 = vld [vmem:[#allocation9 + $0xa8] sm:$0xff]
      %v2137 = vld [vmem:[#allocation9 + $0xb0] sm:$0xff]
      %v2138 = vld [vmem:[#allocation9 + $0xb8] sm:$0xff]
      %v2139 = vld [vmem:[#allocation9 + $0xc0] sm:$0xff]
      %v2140 = vld [vmem:[#allocation9 + $0xc8] sm:$0xff]
      %v2141 = vld [vmem:[#allocation9 + $0xd0] sm:$0xff]
      %v2142 = vld [vmem:[#allocation9 + $0xd8] sm:$0xff]
      %v2143 = vld [vmem:[#allocation9 + $0xe0] sm:$0xff]
      %v2144 = vld [vmem:[#allocation9 + $0xe8] sm:$0xff]
      %v2145 = vld [vmem:[#allocation9 + $0xf0] sm:$0xff]
      %v2146 = vld [vmem:[#allocation9 + $0xf8] sm:$0xff]
      %v2147 = vld [vmem:[#allocation9 + $0x100] sm:$0xff]
      %v2148 = vld [vmem:[#allocation9 + $0x108] sm:$0xff]
      %v2149 = vld [vmem:[#allocation9 + $0x110] sm:$0xff]
      %v2150 = vld [vmem:[#allocation9 + $0x118] sm:$0xff]
      %v2151 = vld [vmem:[#allocation9 + $0x120] sm:$0xff]
      %v2152 = vld [vmem:[#allocation9 + $0x128] sm:$0xff]
      %v2153 = vld [vmem:[#allocation9 + $0x130] sm:$0xff]
      %v2154 = vld [vmem:[#allocation9 + $0x138] sm:$0xff]
      %v2155 = vld [vmem:[#allocation9 + $0x140] sm:$0xff]
      %v2156 = vld [vmem:[#allocation9 + $0x148] sm:$0xff]
      %v2157 = vld [vmem:[#allocation9 + $0x150] sm:$0xff]
      %v2158 = vld [vmem:[#allocation9 + $0x158] sm:$0xff]
      %v2159 = vld [vmem:[#allocation9 + $0x160] sm:$0xff]
      %v2160 = vld [vmem:[#allocation9 + $0x168] sm:$0xff]
      %v2161 = vld [vmem:[#allocation9 + $0x170] sm:$0xff]
      %v2162 = vld [vmem:[#allocation9 + $0x178] sm:$0xff]
      %v2163 = vld [vmem:[#allocation9 + $0x180] sm:$0xff]
      %v2164 = vld [vmem:[#allocation9 + $0x188] sm:$0xff]
      %v2165 = vld [vmem:[#allocation9 + $0x190] sm:$0xff]
      %v2166 = vld [vmem:[#allocation9 + $0x198] sm:$0xff]
      %v2167 = vld [vmem:[#allocation9 + $0x1a0] sm:$0xff]
      %v2168 = vld [vmem:[#allocation9 + $0x1a8] sm:$0xff]
      %v2169 = vld [vmem:[#allocation9 + $0x1b0] sm:$0xff]
      %v2170 = vld [vmem:[#allocation9 + $0x1b8] sm:$0xff]
      %v2171 = vld [vmem:[#allocation9 + $0x1c0] sm:$0xff]
      %v2172 = vld [vmem:[#allocation9 + $0x1c8] sm:$0xff]
      %v2173 = vld [vmem:[#allocation9 + $0x1d0] sm:$0xff]
      %v2174 = vld [vmem:[#allocation9 + $0x1d8] sm:$0xff]
      %v2175 = vld [vmem:[#allocation9 + $0x1e0] sm:$0xff]
      %v2176 = vld [vmem:[#allocation9 + $0x1e8] sm:$0xff]
      %v2177 = vld [vmem:[#allocation9 + $0x1f0] sm:$0xff]
      %v2178 = vld [vmem:[#allocation9 + $0x1f8] sm:$0xff]
      %v2179 = vld [vmem:[%s4] sm:$0x3]
      %v2181 = vperm.slane %v2179, 0
      %v2182 = vperm.slane %v2179, 1
      %v2249 = vunpack.c.l.b16 %v2115
      %v2250 = vunpack.c.h.b16 %v2115
      %v2251 = vunpack.c.l.b16 %v2116
      %v2252 = vunpack.c.h.b16 %v2116
      %v2253 = vunpack.c.l.b16 %v2117
      %v2254 = vunpack.c.h.b16 %v2117
      %v2255 = vunpack.c.l.b16 %v2118
      %v2256 = vunpack.c.h.b16 %v2118
      %v2257 = vunpack.c.l.b16 %v2119
      %v2258 = vunpack.c.h.b16 %v2119
      %v2259 = vunpack.c.l.b16 %v2120
      %v2260 = vunpack.c.h.b16 %v2120
      %v2261 = vunpack.c.l.b16 %v2121
      %v2262 = vunpack.c.h.b16 %v2121
      %v2263 = vunpack.c.l.b16 %v2122
      %v2264 = vunpack.c.h.b16 %v2122
      %v2265 = vunpack.c.l.b16 %v2123
      %v2266 = vunpack.c.h.b16 %v2123
      %v2267 = vunpack.c.l.b16 %v2124
      %v2268 = vunpack.c.h.b16 %v2124
      %v2269 = vunpack.c.l.b16 %v2125
      %v2270 = vunpack.c.h.b16 %v2125
      %v2271 = vunpack.c.l.b16 %v2126
      %v2272 = vunpack.c.h.b16 %v2126
      %v2273 = vunpack.c.l.b16 %v2127
      %v2274 = vunpack.c.h.b16 %v2127
      %v2275 = vunpack.c.l.b16 %v2128
      %v2276 = vunpack.c.h.b16 %v2128
      %v2277 = vunpack.c.l.b16 %v2129
      %v2278 = vunpack.c.h.b16 %v2129
      %v2279 = vunpack.c.l.b16 %v2130
      %v2280 = vunpack.c.h.b16 %v2130
      %v2281 = vunpack.c.l.b16 %v2131
      %v2282 = vunpack.c.h.b16 %v2131
      %v2283 = vunpack.c.l.b16 %v2132
      %v2284 = vunpack.c.h.b16 %v2132
      %v2285 = vunpack.c.l.b16 %v2133
      %v2286 = vunpack.c.h.b16 %v2133
      %v2287 = vunpack.c.l.b16 %v2134
      %v2288 = vunpack.c.h.b16 %v2134
      %v2289 = vunpack.c.l.b16 %v2135
      %v2290 = vunpack.c.h.b16 %v2135
      %v2291 = vunpack.c.l.b16 %v2136
      %v2292 = vunpack.c.h.b16 %v2136
      %v2293 = vunpack.c.l.b16 %v2137
      %v2294 = vunpack.c.h.b16 %v2137
      %v2295 = vunpack.c.l.b16 %v2138
      %v2296 = vunpack.c.h.b16 %v2138
      %v2297 = vunpack.c.l.b16 %v2139
      %v2298 = vunpack.c.h.b16 %v2139
      %v2299 = vunpack.c.l.b16 %v2140
      %v2300 = vunpack.c.h.b16 %v2140
      %v2301 = vunpack.c.l.b16 %v2141
      %v2302 = vunpack.c.h.b16 %v2141
      %v2303 = vunpack.c.l.b16 %v2142
      %v2304 = vunpack.c.h.b16 %v2142
      %v2305 = vunpack.c.l.b16 %v2143
      %v2306 = vunpack.c.h.b16 %v2143
      %v2307 = vunpack.c.l.b16 %v2144
      %v2308 = vunpack.c.h.b16 %v2144
      %v2309 = vunpack.c.l.b16 %v2145
      %v2310 = vunpack.c.h.b16 %v2145
      %v2311 = vunpack.c.l.b16 %v2146
      %v2312 = vunpack.c.h.b16 %v2146
      %v2313 = vunpack.c.l.b16 %v2147
      %v2314 = vunpack.c.h.b16 %v2147
      %v2315 = vunpack.c.l.b16 %v2148
      %v2316 = vunpack.c.h.b16 %v2148
      %v2317 = vunpack.c.l.b16 %v2149
      %v2318 = vunpack.c.h.b16 %v2149
      %v2319 = vunpack.c.l.b16 %v2150
      %v2320 = vunpack.c.h.b16 %v2150
      %v2321 = vunpack.c.l.b16 %v2151
      %v2322 = vunpack.c.h.b16 %v2151
      %v2323 = vunpack.c.l.b16 %v2152
      %v2324 = vunpack.c.h.b16 %v2152
      %v2325 = vunpack.c.l.b16 %v2153
      %v2326 = vunpack.c.h.b16 %v2153
      %v2327 = vunpack.c.l.b16 %v2154
      %v2328 = vunpack.c.h.b16 %v2154
      %v2329 = vunpack.c.l.b16 %v2155
      %v2330 = vunpack.c.h.b16 %v2155
      %v2331 = vunpack.c.l.b16 %v2156
      %v2332 = vunpack.c.h.b16 %v2156
      %v2333 = vunpack.c.l.b16 %v2157
      %v2334 = vunpack.c.h.b16 %v2157
      %v2335 = vunpack.c.l.b16 %v2158
      %v2336 = vunpack.c.h.b16 %v2158
      %v2337 = vunpack.c.l.b16 %v2159
      %v2338 = vunpack.c.h.b16 %v2159
      %v2339 = vunpack.c.l.b16 %v2160
      %v2340 = vunpack.c.h.b16 %v2160
      %v2341 = vunpack.c.l.b16 %v2161
      %v2342 = vunpack.c.h.b16 %v2161
      %v2343 = vunpack.c.l.b16 %v2162
      %v2344 = vunpack.c.h.b16 %v2162
      %v2345 = vunpack.c.l.b16 %v2163
      %v2346 = vunpack.c.h.b16 %v2163
      %v2347 = vunpack.c.l.b16 %v2164
      %v2348 = vunpack.c.h.b16 %v2164
      %v2349 = vunpack.c.l.b16 %v2165
      %v2350 = vunpack.c.h.b16 %v2165
      %v2351 = vunpack.c.l.b16 %v2166
      %v2352 = vunpack.c.h.b16 %v2166
      %v2353 = vunpack.c.l.b16 %v2167
      %v2354 = vunpack.c.h.b16 %v2167
      %v2355 = vunpack.c.l.b16 %v2168
      %v2356 = vunpack.c.h.b16 %v2168
      %v2357 = vunpack.c.l.b16 %v2169
      %v2358 = vunpack.c.h.b16 %v2169
      %v2359 = vunpack.c.l.b16 %v2170
      %v2360 = vunpack.c.h.b16 %v2170
      %v2361 = vunpack.c.l.b16 %v2171
      %v2362 = vunpack.c.h.b16 %v2171
      %v2363 = vunpack.c.l.b16 %v2172
      %v2364 = vunpack.c.h.b16 %v2172
      %v2365 = vunpack.c.l.b16 %v2173
      %v2366 = vunpack.c.h.b16 %v2173
      %v2367 = vunpack.c.l.b16 %v2174
      %v2368 = vunpack.c.h.b16 %v2174
      %v2369 = vunpack.c.l.b16 %v2175
      %v2370 = vunpack.c.h.b16 %v2175
      %v2371 = vunpack.c.l.b16 %v2176
      %v2372 = vunpack.c.h.b16 %v2176
      %v2373 = vunpack.c.l.b16 %v2177
      %v2374 = vunpack.c.h.b16 %v2177
      %v2375 = vunpack.c.l.b16 %v2178
      %v2376 = vunpack.c.h.b16 %v2178
      %v2377 = vpack.c.b16 %v2251, %v2249
      %v2378 = vpack.c.b16 %v2252, %v2250
      %v2379 = vpack.c.b16 %v2255, %v2253
      %v2380 = vpack.c.b16 %v2256, %v2254
      %v2381 = vpack.c.b16 %v2259, %v2257
      %v2382 = vpack.c.b16 %v2260, %v2258
      %v2383 = vpack.c.b16 %v2263, %v2261
      %v2384 = vpack.c.b16 %v2264, %v2262
      %v2385 = vpack.c.b16 %v2267, %v2265
      %v2386 = vpack.c.b16 %v2268, %v2266
      %v2387 = vpack.c.b16 %v2271, %v2269
      %v2388 = vpack.c.b16 %v2272, %v2270
      %v2389 = vpack.c.b16 %v2275, %v2273
      %v2390 = vpack.c.b16 %v2276, %v2274
      %v2391 = vpack.c.b16 %v2279, %v2277
      %v2392 = vpack.c.b16 %v2280, %v2278
      %v2393 = vpack.c.b16 %v2283, %v2281
      %v2394 = vpack.c.b16 %v2284, %v2282
      %v2395 = vpack.c.b16 %v2287, %v2285
      %v2396 = vpack.c.b16 %v2288, %v2286
      %v2397 = vpack.c.b16 %v2291, %v2289
      %v2398 = vpack.c.b16 %v2292, %v2290
      %v2399 = vpack.c.b16 %v2295, %v2293
      %v2400 = vpack.c.b16 %v2296, %v2294
      %v2401 = vpack.c.b16 %v2299, %v2297
      %v2402 = vpack.c.b16 %v2300, %v2298
      %v2403 = vpack.c.b16 %v2303, %v2301
      %v2404 = vpack.c.b16 %v2304, %v2302
      %v2405 = vpack.c.b16 %v2307, %v2305
      %v2406 = vpack.c.b16 %v2308, %v2306
      %v2407 = vpack.c.b16 %v2311, %v2309
      %v2408 = vpack.c.b16 %v2312, %v2310
      %v2409 = vpack.c.b16 %v2315, %v2313
      %v2410 = vpack.c.b16 %v2316, %v2314
      %v2411 = vpack.c.b16 %v2319, %v2317
      %v2412 = vpack.c.b16 %v2320, %v2318
      %v2413 = vpack.c.b16 %v2323, %v2321
      %v2414 = vpack.c.b16 %v2324, %v2322
      %v2415 = vpack.c.b16 %v2327, %v2325
      %v2416 = vpack.c.b16 %v2328, %v2326
      %v2417 = vpack.c.b16 %v2331, %v2329
      %v2418 = vpack.c.b16 %v2332, %v2330
      %v2419 = vpack.c.b16 %v2335, %v2333
      %v2420 = vpack.c.b16 %v2336, %v2334
      %v2421 = vpack.c.b16 %v2339, %v2337
      %v2422 = vpack.c.b16 %v2340, %v2338
      %v2423 = vpack.c.b16 %v2343, %v2341
      %v2424 = vpack.c.b16 %v2344, %v2342
      %v2425 = vpack.c.b16 %v2347, %v2345
      %v2426 = vpack.c.b16 %v2348, %v2346
      %v2427 = vpack.c.b16 %v2351, %v2349
      %v2428 = vpack.c.b16 %v2352, %v2350
      %v2429 = vpack.c.b16 %v2355, %v2353
      %v2430 = vpack.c.b16 %v2356, %v2354
      %v2431 = vpack.c.b16 %v2359, %v2357
      %v2432 = vpack.c.b16 %v2360, %v2358
      %v2433 = vpack.c.b16 %v2363, %v2361
      %v2434 = vpack.c.b16 %v2364, %v2362
      %v2435 = vpack.c.b16 %v2367, %v2365
      %v2436 = vpack.c.b16 %v2368, %v2366
      %v2437 = vpack.c.b16 %v2371, %v2369
      %v2438 = vpack.c.b16 %v2372, %v2370
      %v2439 = vpack.c.b16 %v2375, %v2373
      %v2440 = vpack.c.b16 %v2376, %v2374
      %2505 = vmatpush.bf16.msra.mxu0 %v2391
      %2506 = vmatpush.bf16.msra.mxu0 %v2389
      %2507 = vmatpush.bf16.msra.mxu0 %v2387
      %2508 = vmatpush.bf16.msra.mxu0 %v2385
      %2509 = vmatpush.bf16.msra.mxu0 %v2383
      %2510 = vmatpush.bf16.msra.mxu0 %v2381
      %2511 = vmatpush.bf16.msra.mxu0 %v2379
      %2512 = vmatpush.bf16.msra.mxu0 %v2377
      %2513 = vmatmul.bf16.gmra.mxu0 %v2111
      %v2514 = vpop.f32.mrf.mxu0
      %v2515 = vadd.f32 %v2181, %v2514
      %v2516 = vpop.f32.mrf.mxu0
      %2517 = vdwg.mxu0
      %2518 = vmatpush.bf16.msra.mxu0 %v2407
      %2519 = vmatpush.bf16.msra.mxu0 %v2405
      %2520 = vmatpush.bf16.msra.mxu0 %v2403
      %2521 = vmatpush.bf16.msra.mxu0 %v2401
      %2522 = vmatpush.bf16.msra.mxu0 %v2399
      %2523 = vmatpush.bf16.msra.mxu0 %v2397
      %2524 = vmatpush.bf16.msra.mxu0 %v2395
      %2525 = vmatpush.bf16.msra.mxu0 %v2393
      %2526 = vmatmul.bf16.gmra.mxu0 %v2112
      %v2527 = vpop.f32.mrf.mxu0
      %v2528 = vadd.f32 %v2515, %v2527
      %v2529 = vpop.f32.mrf.mxu0
      %2530 = vdwg.mxu0
      %2531 = vmatpush.bf16.msra.mxu0 %v2423
      %2532 = vmatpush.bf16.msra.mxu0 %v2421
      %2533 = vmatpush.bf16.msra.mxu0 %v2419
      %2534 = vmatpush.bf16.msra.mxu0 %v2417
      %2535 = vmatpush.bf16.msra.mxu0 %v2415
      %2536 = vmatpush.bf16.msra.mxu0 %v2413
      %2537 = vmatpush.bf16.msra.mxu0 %v2411
      %2538 = vmatpush.bf16.msra.mxu0 %v2409
      %2539 = vmatmul.bf16.gmra.mxu0 %v2113
      %v2540 = vpop.f32.mrf.mxu0
      %v2541 = vadd.f32 %v2528, %v2540
      %v2542 = vpop.f32.mrf.mxu0
      %2543 = vdwg.mxu0
      %2544 = vmatpush.bf16.msra.mxu0 %v2439
      %2545 = vmatpush.bf16.msra.mxu0 %v2437
      %2546 = vmatpush.bf16.msra.mxu0 %v2435
      %2547 = vmatpush.bf16.msra.mxu0 %v2433
      %2548 = vmatpush.bf16.msra.mxu0 %v2431
      %2549 = vmatpush.bf16.msra.mxu0 %v2429
      %2550 = vmatpush.bf16.msra.mxu0 %v2427
      %2551 = vmatpush.bf16.msra.mxu0 %v2425
      %2552 = vmatmul.bf16.gmra.mxu0 %v2114
      %v2553 = vpop.f32.mrf.mxu0
      %v2554 = vadd.f32 %v2541, %v2553
      %v2555 = vpop.f32.mrf.mxu0
      %2556 = vdwg.mxu0
      %2557 = vmatpush.bf16.msra.mxu0 %v2392
      %2558 = vmatpush.bf16.msra.mxu0 %v2390
      %2559 = vmatpush.bf16.msra.mxu0 %v2388
      %2560 = vmatpush.bf16.msra.mxu0 %v2386
      %2561 = vmatpush.bf16.msra.mxu0 %v2384
      %2562 = vmatpush.bf16.msra.mxu0 %v2382
      %2563 = vmatpush.bf16.msra.mxu0 %v2380
      %2564 = vmatpush.bf16.msra.mxu0 %v2378
      %2565 = vmatmul.bf16.gmra.mxu0 %v2111
      %v2566 = vpop.f32.mrf.mxu0
      %v2567 = vadd.f32 %v2182, %v2566
      %v2568 = vpop.f32.mrf.mxu0
      %2569 = vdwg.mxu0
      %2570 = vmatpush.bf16.msra.mxu0 %v2408
      %2571 = vmatpush.bf16.msra.mxu0 %v2406
      %2572 = vmatpush.bf16.msra.mxu0 %v2404
      %2573 = vmatpush.bf16.msra.mxu0 %v2402
      %2574 = vmatpush.bf16.msra.mxu0 %v2400
      %2575 = vmatpush.bf16.msra.mxu0 %v2398
      %2576 = vmatpush.bf16.msra.mxu0 %v2396
      %2577 = vmatpush.bf16.msra.mxu0 %v2394
      %2578 = vmatmul.bf16.gmra.mxu0 %v2112
      %v2579 = vpop.f32.mrf.mxu0
      %v2580 = vadd.f32 %v2567, %v2579
      %v2581 = vpop.f32.mrf.mxu0
      %2582 = vdwg.mxu0
      %2583 = vmatpush.bf16.msra.mxu0 %v2424
      %2584 = vmatpush.bf16.msra.mxu0 %v2422
      %2585 = vmatpush.bf16.msra.mxu0 %v2420
      %2586 = vmatpush.bf16.msra.mxu0 %v2418
      %2587 = vmatpush.bf16.msra.mxu0 %v2416
      %2588 = vmatpush.bf16.msra.mxu0 %v2414
      %2589 = vmatpush.bf16.msra.mxu0 %v2412
      %2590 = vmatpush.bf16.msra.mxu0 %v2410
      %2591 = vmatmul.bf16.gmra.mxu0 %v2113
      %v2592 = vpop.f32.mrf.mxu0
      %v2593 = vadd.f32 %v2580, %v2592
      %v2594 = vpop.f32.mrf.mxu0
      %2595 = vdwg.mxu0
      %2596 = vmatpush.bf16.msra.mxu0 %v2440
      %2597 = vmatpush.bf16.msra.mxu0 %v2438
      %2598 = vmatpush.bf16.msra.mxu0 %v2436
      %2599 = vmatpush.bf16.msra.mxu0 %v2434
      %2600 = vmatpush.bf16.msra.mxu0 %v2432
      %2601 = vmatpush.bf16.msra.mxu0 %v2430
      %2602 = vmatpush.bf16.msra.mxu0 %v2428
      %2603 = vmatpush.bf16.msra.mxu0 %v2426
      %2604 = vmatmul.bf16.gmra.mxu0 %v2114
      %v2605 = vpop.f32.mrf.mxu0
      %v2606 = vadd.f32 %v2593, %v2605
      %v2607 = vpop.f32.mrf.mxu0
      %2608 = vdwg.mxu0
      %vm2609 = vcmp.gt.f32.partialorder %v2554, 0.0
      %vm2610 = vcmp.gt.f32.partialorder %v2606, 0.0
      %v2611 = vmul.f32 %v2554, 0.2
      %v2612 = vmul.f32 %v2606, 0.2
      %v2613 = vsel %vm2609, %v2554, %v2611
      %v2614 = vsel %vm2610, %v2606, %v2612
      %v2615 = vld [vmem:[%s5] sm:$0x3]
      %v2617 = vperm.slane %v2615, 0
      %v2618 = vperm.slane %v2615, 1
      %v2621 = vmul.f32 %v2613, %v2617
      %v2622 = vmul.f32 %v2614, %v2618
      %v2623 = vsel %vm2071, %v2621, 0.0
      %v2624 = vsel %vm2071, %v2622, 0.0
      %v2625 = vadd.f32 %v2623, %v2624
      %2626 = vadd.xlane.f32.xlu0 %v2625
      %v2627 = vpop.xlane.xlu0 %2626
      %v2628 = vld [vmem:[#allocation3] sm:$0x1]
      %v2630 = vperm.slane %v2628, 0
      %v2632 = vadd.f32 %v2627, %v2630
      %v2633 = vxor.u32 %v2632, 2147483648
      %v2634 = vmul.f32 %v2633, 1.442695
      %v2635 = vpow.pop %v2634
      %v2636 = vadd.f32 %v2635, 1.0
      %v2637 = vrcp.pop %v2636
      %v2638 = vmul.f32 %v2636, %v2637
      %v2639 = vsub.f32 1.0, %v2638
      %v2640 = vmul.f32 %v2637, %v2639
      %v2641 = vadd.f32 %v2637, %v2640
      %vm2642 = vweird.f32 %v2636
      %vm2643 = vweird.f32 %v2637
      %vm2644 = vmor %vm2642, %vm2643
      %v2645 = vsel %vm2644, %v2637, %v2641
      %v2646 = vand.u32 2147483647, %v2636
      %vm2647 = vcmp.eq.f32.partialorder %v2646, 8.507059e+37
      %v2648 = vand.u32 %v2636, 2147483648
      %v2649 = vor.u32 1.1754944e-38, %v2648
      %v2650 = vsel %vm2647, %v2649, %v2645
      %v2651 = vmul.f32 1.0, %v2650
      %vm2652 = vcmask 1024
      %2653 = vst.msk [vmem:[%s7] sm:$0x3] %vm2652, %v2651
    $region53: #{tpu_custom_call.1} parent=1 // pred_fallthru
      _
    // Predicated region
    $region54: #{tpu_custom_call.1} parent=1 // pred_check
      _
    $region55: #{tpu_custom_call.1} parent=1 // pred_check_branch
      %2655 = sbr.rel (0) target = $region57
    $region56: #{tpu_custom_call.1} parent=1 // pred_region
      _
    $region57: #{tpu_custom_call.1} parent=1 // pred_fallthru
      _
    // Predicated region
    $region58: #{tpu_custom_call.1} parent=1 // pred_check
      _
    $region59: #{tpu_custom_call.1} parent=1 // pred_check_branch
      %2657 = sbr.rel (0) target = $region61
    $region60: #{tpu_custom_call.1} parent=1 // pred_region
      _
    $region61: #{tpu_custom_call.1} parent=1 // pred_fallthru
      _
    %2658 = vsyncpa [#allocation5], 1
    %2659 = vsyncpa [#allocation7], 1
    %2660 = vsyncpa [#allocation10], 1

</llo_original>
